<compile_context>
chip_gen: v6e
topology: v6e:2x2x1
jax: 0.10.0
libtpu: 0.0.40
codegen_flags: <defaults>
</compile_context>

<pallas_src>
import jax
import jax.numpy as jnp
from jax.experimental import pallas as pl
from jax.experimental.pallas import tpu as pltpu


# ----------------------------------------------------------------------------
# Kernel
# ----------------------------------------------------------------------------
def _decoder_step_kernel(ids_ref, hid_ref, enc_ref, emb_hbm,
                         w_ie_ref, w_ic_ref, w_hh_ref, b_ih_ref, b_hh_ref,
                         wvh_ref, wvc_ref, bv_ref,
                         logits_ref, lse_ref, hnew_ref,
                         emb_buf, gsem, h_sc, c_sc, m_sc, s_sc):
    j = pl.program_id(0)
    B = emb_buf.shape[0]

    # ---------------- grid step 0: gather + attention + GRU -----------------
    @pl.when(j == 0)
    def _prologue():
        # -- embedding gather: DMA only B rows of the HBM table into VMEM --
        copies = []
        for b in range(B):
            cp = pltpu.make_async_copy(
                emb_hbm.at[pl.ds(ids_ref[b], 1)],   # (1, I) row in HBM
                emb_buf.at[pl.ds(b, 1)],            # (1, I) row in VMEM
                gsem.at[b])
            cp.start()
            copies.append(cp)
        for cp in copies:
            cp.wait()

        h = hid_ref[...]                            # (B, H)
        enc = enc_ref[...]                          # (B, T, H)

        # -- dot-product attention on the MXU (softmax over T) --
        scores = jnp.einsum("bqh,bth->bqt", h[:, None, :], enc,
                            preferred_element_type=jnp.float32)[:, 0, :]   # (B,T)
        scores = scores - jnp.max(scores, axis=-1, keepdims=True)
        e = jnp.exp(scores)
        attn = e * pl.reciprocal(jnp.sum(e, axis=-1, keepdims=True))
        ctx = jnp.einsum("bqt,bth->bqh", attn[:, None, :], enc,
                         preferred_element_type=jnp.float32)[:, 0, :]      # (B,H)

        # -- GRU cell, gates pre-split (r, z, n): no concat, no odd slices --
        x_e = emb_buf[...]                          # (B, I)

        def gate(g):
            gi = (jnp.dot(x_e, w_ie_ref[g], preferred_element_type=jnp.float32)
                  + jnp.dot(ctx, w_ic_ref[g], preferred_element_type=jnp.float32)
                  + b_ih_ref[g])
            gh = (jnp.dot(h, w_hh_ref[g], preferred_element_type=jnp.float32)
                  + b_hh_ref[g])
            return gi, gh

        gi_r, gh_r = gate(0)
        gi_z, gh_z = gate(1)
        gi_n, gh_n = gate(2)
        r = jax.nn.sigmoid(gi_r + gh_r)
        z = jax.nn.sigmoid(gi_z + gh_z)
        n = jnp.tanh(gi_n + r * gh_n)
        h_new = (1.0 - z) * n + z * h               # (B, H)

        h_sc[...] = h_new
        c_sc[...] = ctx
        hnew_ref[...] = h_new

        # init online-logsumexp state
        m_sc[...] = jnp.full_like(m_sc, -jnp.inf)
        s_sc[...] = jnp.zeros_like(s_sc)

    # ------------- every grid step: one vocab tile of the projection --------
    logits = (jnp.dot(h_sc[...], wvh_ref[...], preferred_element_type=jnp.float32)
              + jnp.dot(c_sc[...], wvc_ref[...], preferred_element_type=jnp.float32)
              + bv_ref[...])                        # (B, TILE_V)
    logits_ref[...] = logits

    # online logsumexp across vocab tiles
    m_prev = m_sc[...]
    m_new = jnp.maximum(m_prev, jnp.max(logits, axis=-1, keepdims=True))
    s_sc[...] = (s_sc[...] * jnp.exp(m_prev - m_new)
                 + jnp.sum(jnp.exp(logits - m_new), axis=-1, keepdims=True))
    m_sc[...] = m_new

    @pl.when(j == pl.num_programs(0) - 1)
    def _epilogue():
        lse_ref[...] = m_sc[...] + jnp.log(s_sc[...])


# ----------------------------------------------------------------------------
# Wrapper
# ----------------------------------------------------------------------------
def decoder_forward_bth(last_output, last_hidden, enc_bth, params):
    """last_output: (B,) int32; last_hidden: (B,H) f32; enc_bth: (B,T,H) f32."""
    B, H = last_hidden.shape
    _, T, _ = enc_bth.shape
    V = params["vocab_size"]
    V_pad = params["v_pad"]
    TILE_V = params["tile_v"]
    I = params["emb"].shape[1]
    n_tiles = V_pad // TILE_V

    ids = last_output.astype(jnp.int32)             # (B,) -> SMEM

    in_specs = [
        pl.BlockSpec(memory_space=pltpu.MemorySpace.SMEM),     # ids
        pl.BlockSpec((B, H), lambda j: (0, 0)),                # hidden (resident)
        pl.BlockSpec((B, T, H), lambda j: (0, 0, 0)),          # encoder outputs
        pl.BlockSpec(memory_space=pl.ANY),                     # embedding table (HBM)
        pl.BlockSpec((3, I, H), lambda j: (0, 0, 0)),          # W_ih (embedded part)
        pl.BlockSpec((3, H, H), lambda j: (0, 0, 0)),          # W_ih (context part)
        pl.BlockSpec((3, H, H), lambda j: (0, 0, 0)),          # W_hh
        pl.BlockSpec((3, 1, H), lambda j: (0, 0, 0)),          # b_ih
        pl.BlockSpec((3, 1, H), lambda j: (0, 0, 0)),          # b_hh
        pl.BlockSpec((H, TILE_V), lambda j: (0, j)),           # W_out (h part), vocab-tiled
        pl.BlockSpec((H, TILE_V), lambda j: (0, j)),           # W_out (ctx part), vocab-tiled
        pl.BlockSpec((1, TILE_V), lambda j: (0, j)),           # b_out, vocab-tiled
    ]
    out_specs = (
        pl.BlockSpec((B, TILE_V), lambda j: (0, j)),           # raw logits (padded V)
        pl.BlockSpec((B, 1), lambda j: (0, 0)),                # logsumexp
        pl.BlockSpec((B, H), lambda j: (0, 0)),                # new hidden
    )
    out_shape = (
        jax.ShapeDtypeStruct((B, V_pad), jnp.float32),
        jax.ShapeDtypeStruct((B, 1), jnp.float32),
        jax.ShapeDtypeStruct((B, H), jnp.float32),
    )
    scratch_shapes = [
        pltpu.VMEM((B, I), jnp.float32),        # gathered embedding rows
        pltpu.SemaphoreType.DMA((B,)),          # per-row gather semaphores
        pltpu.VMEM((B, H), jnp.float32),        # h_new (resident across tiles)
        pltpu.VMEM((B, H), jnp.float32),        # context (resident across tiles)
        pltpu.VMEM((B, 1), jnp.float32),        # running max
        pltpu.VMEM((B, 1), jnp.float32),        # running sum
    ]

    # VMEM budget: resident set + double-buffered vocab tiles (+50% headroom).
    fp32 = 4
    resident_bytes = fp32 * (B * H + B * T * H
                             + 3 * (I * H + 2 * H * H) + 6 * H
                             + B * I + 2 * B * H + 2 * B
                             + B * H + B)
    per_tile_bytes = fp32 * (2 * H * TILE_V + TILE_V + B * TILE_V)
    vmem_limit = int(min(max(3 * (resident_bytes + 2 * per_tile_bytes),
                             32 * 1024 * 1024), 64 * 1024 * 1024))

    cost = pl.CostEstimate(
        flops=int(2 * B * (2 * T * H + 3 * (I * H + 2 * H * H) + 2 * H * V_pad)),
        transcendentals=int(B * (T + 6 * H + 2 * V_pad)),
        bytes_accessed=int(fp32 * (B * I + B * T * H + 2 * B * H
                                   + 3 * (I * H + 2 * H * H) + 6 * H
                                   + 2 * H * V_pad + V_pad + B * V_pad + B)),
    )

    logits_pad, lse, h_new = pl.pallas_call(
        _decoder_step_kernel,
        out_shape=out_shape,
        grid=(n_tiles,),
        in_specs=in_specs,
        out_specs=out_specs,
        scratch_shapes=scratch_shapes,
        compiler_params=pltpu.CompilerParams(
            dimension_semantics=("arbitrary",),   # vocab axis carries the LSE reduction
            vmem_limit_bytes=vmem_limit),
        cost_estimate=cost,
    )(ids, last_hidden, enc_bth, params["emb"],
      params["w_ie"], params["w_ic"], params["w_hh_g"],
      params["b_ih_g"], params["b_hh_g"],
      params["w_out_h_p"], params["w_out_c_p"], params["b_out_p"])

    log_probs = logits_pad[:, :V] - lse             # log_softmax, padded cols dropped
    return log_probs, h_new


def decoder_forward(last_output, last_hidden, encoder_outputs, params):
    """PyTorch-layout entry point: encoder_outputs is (T, B, H).
    In an autoregressive decode loop, do this transpose ONCE outside the loop
    and call decoder_forward_bth directly with (B, T, H)."""
    enc_bth = jnp.transpose(encoder_outputs, (1, 0, 2))
    return decoder_forward_bth(last_output, last_hidden, enc_bth, params)


# ----------------------------------------------------------------------------
# Parameters (PyTorch-layout tensors for the reference + kernel-layout tensors)
# ----------------------------------------------------------------------------
def _round_up(x, m):
    return ((x + m - 1) // m) * m


def make_params(key, vocab_size, input_size, hidden_size):
    V, I, H = vocab_size, input_size, hidden_size
    ks = jax.random.split(key, 6)

    # embedding: uniform(-0.25, 0.25)  (mirrors load_embedding init)
    emb = jax.random.uniform(ks[0], (V, I), jnp.float32, -0.25, 0.25)
    # GRU weight_ih_l0: orthogonal init, shape (3H, I+H)
    a = jax.random.normal(ks[1], (3 * H, I + H), jnp.float32)
    w_ih, _ = jnp.linalg.qr(a)
    # GRU weight_hh_l0: uniform(-0.01, 0.01), shape (3H, H)
    w_hh = jax.random.uniform(ks[2], (3 * H, H), jnp.float32, -0.01, 0.01)
    bound = 1.0 / float(H) ** 0.5
    b_ih = jax.random.uniform(ks[3], (3 * H,), jnp.float32, -bound, bound)
    b_hh = jax.random.uniform(ks[4], (3 * H,), jnp.float32, -bound, bound)
    # output linear: (V, 2H) weight + (V,) bias
    bound_o = 1.0 / float(2 * H) ** 0.5
    kw, kb = jax.random.split(ks[5])
    w_out = jax.random.uniform(kw, (V, 2 * H), jnp.float32, -bound_o, bound_o)
    b_out = jax.random.uniform(kb, (V,), jnp.float32, -bound_o, bound_o)

    # ---- repack for the kernel: split gates / split concat operands ----
    w_ih_e = w_ih[:, :I]                               # acts on embedded word
    w_ih_c = w_ih[:, I:]                               # acts on attention context
    w_ie = jnp.stack([w_ih_e[g * H:(g + 1) * H].T for g in range(3)])       # (3,I,H)
    w_ic = jnp.stack([w_ih_c[g * H:(g + 1) * H].T for g in range(3)])       # (3,H,H)
    w_hh_g = jnp.stack([w_hh[g * H:(g + 1) * H].T for g in range(3)])       # (3,H,H)
    b_ih_g = jnp.stack([b_ih[g * H:(g + 1) * H].reshape(1, H) for g in range(3)])
    b_hh_g = jnp.stack([b_hh[g * H:(g + 1) * H].reshape(1, H) for g in range(3)])

    # output projection: split (h | context) and pad vocab to a lane-aligned tile
    tile_v = min(1024, _round_up(V, 128))
    v_pad = _round_up(V, tile_v)
    pad = v_pad - V
    w_out_h_p = jnp.pad(w_out[:, :H].T, ((0, 0), (0, pad)))                 # (H,Vp)
    w_out_c_p = jnp.pad(w_out[:, H:].T, ((0, 0), (0, pad)))                 # (H,Vp)
    b_out_p = jnp.pad(b_out.reshape(1, V), ((0, 0), (0, pad)),
                      constant_values=-1e30)                                # (1,Vp)

    return {
        # PyTorch-layout tensors (used by the pure-JAX reference)
        "emb": emb, "w_ih": w_ih, "w_hh": w_hh, "b_ih": b_ih, "b_hh": b_hh,
        "w_out": w_out, "b_out": b_out,
        # kernel-layout tensors
        "w_ie": w_ie, "w_ic": w_ic, "w_hh_g": w_hh_g,
        "b_ih_g": b_ih_g, "b_hh_g": b_hh_g,
        "w_out_h_p": w_out_h_p, "w_out_c_p": w_out_c_p, "b_out_p": b_out_p,
        "vocab_size": V, "v_pad": v_pad, "tile_v": tile_v,
    }


# ----------------------------------------------------------------------------
# Pure-JAX reference (replica of Decoder.forward) for a correctness check
# ----------------------------------------------------------------------------
def reference_forward(last_output, last_hidden, encoder_outputs, params):
    H = last_hidden.shape[1]
    embedded = params["emb"][last_output]                     # (B, I)
    enc = jnp.transpose(encoder_outputs, (1, 0, 2))           # (B, T, H)
    scores = jnp.einsum("bh,bth->bt", last_hidden, enc)
    attn = jax.nn.softmax(scores, axis=1)
    context = jnp.einsum("bt,bth->bh", attn, enc)             # (B, H)
    x = jnp.concatenate([embedded, context], axis=1)
    gi = x @ params["w_ih"].T + params["b_ih"]
    gh = last_hidden @ params["w_hh"].T + params["b_hh"]
    r = jax.nn.sigmoid(gi[:, :H] + gh[:, :H])
    z = jax.nn.sigmoid(gi[:, H:2 * H] + gh[:, H:2 * H])
    n = jnp.tanh(gi[:, 2 * H:] + r * gh[:, 2 * H:])
    h_new = (1.0 - z) * n + z * last_hidden
    logits = jnp.concatenate([h_new, context], axis=1) @ params["w_out"].T + params["b_out"]
    return jax.nn.log_softmax(logits, axis=1), h_new


# ----------------------------------------------------------------------------
if __name__ == "__main__":
    B, T, I, H, V = 2, 8, 16, 32, 64

    key = jax.random.PRNGKey(0)
    kp, kh, ke, kt = jax.random.split(key, 4)
    params = make_params(kp, V, I, H)

    last_output = jax.random.randint(kt, (B,), 1, V).astype(jnp.int32)   # (B,)
    last_hidden = jax.random.normal(kh, (B, H), jnp.float32)             # (B, H)
    encoder_outputs = jax.random.normal(ke, (T, B, H), jnp.float32)      # (T, B, H)

    log_probs, h_new = decoder_forward(last_output, last_hidden, encoder_outputs, params)
    jax.block_until_ready((log_probs, h_new))

    ref_lp, ref_h = reference_forward(last_output, last_hidden, encoder_outputs, params)
    assert log_probs.shape == (B, V) and h_new.shape == (B, H)
    assert jnp.allclose(log_probs, ref_lp, atol=1e-4, rtol=1e-3), \
        float(jnp.max(jnp.abs(log_probs - ref_lp)))
    assert jnp.allclose(h_new, ref_h, atol=1e-4, rtol=1e-3), \
        float(jnp.max(jnp.abs(h_new - ref_h)))

    print("KERNEL_OK")
</pallas_src>

<mosaic_0001>
module attributes {stable_mosaic.version = 11 : i64} {
  func.func @_decoder_step_kernel(%arg0: i32, %arg1: memref<2xi32, #tpu.memory_space<smem>>, %arg2: memref<2x32xf32, #tpu.memory_space<vmem>>, %arg3: memref<2x8x32xf32, #tpu.memory_space<vmem>>, %arg4: memref<64x16xf32, #tpu.memory_space<any>>, %arg5: memref<3x16x32xf32, #tpu.memory_space<vmem>>, %arg6: memref<3x32x32xf32, #tpu.memory_space<vmem>>, %arg7: memref<3x32x32xf32, #tpu.memory_space<vmem>>, %arg8: memref<3x1x32xf32, #tpu.memory_space<vmem>>, %arg9: memref<3x1x32xf32, #tpu.memory_space<vmem>>, %arg10: memref<32x128xf32, #tpu.memory_space<vmem>>, %arg11: memref<32x128xf32, #tpu.memory_space<vmem>>, %arg12: memref<1x128xf32, #tpu.memory_space<vmem>>, %arg13: memref<2x128xf32, #tpu.memory_space<vmem>>, %arg14: memref<2x1xf32, #tpu.memory_space<vmem>>, %arg15: memref<2x32xf32, #tpu.memory_space<vmem>>, %arg16: memref<2x16xf32, #tpu.memory_space<vmem>>, %arg17: memref<2x!tpu.dma_semaphore, #tpu.memory_space<semaphore_mem>>, %arg18: memref<2x32xf32, #tpu.memory_space<vmem>>, %arg19: memref<2x32xf32, #tpu.memory_space<vmem>>, %arg20: memref<2x1xf32, #tpu.memory_space<vmem>>, %arg21: memref<2x1xf32, #tpu.memory_space<vmem>>) attributes {dimension_semantics = [#tpu.dimension_semantics<arbitrary>], iteration_bounds = array<i64: 1>, scalar_prefetch = 0 : i64, scratch_operands = 6 : i64, tpu.core_type = #tpu.core_type<tc>, window_params = [{transform_indices = @transform_0, window_bounds = array<i64: 2>}, {pipeline_mode = #tpu.pipeline_mode<synchronous>, transform_indices = @transform_1, window_bounds = array<i64: 2, 32>}, {pipeline_mode = #tpu.pipeline_mode<synchronous>, transform_indices = @transform_2, window_bounds = array<i64: 2, 8, 32>}, {}, {pipeline_mode = #tpu.pipeline_mode<synchronous>, transform_indices = @transform_4, window_bounds = array<i64: 3, 16, 32>}, {pipeline_mode = #tpu.pipeline_mode<synchronous>, transform_indices = @transform_5, window_bounds = array<i64: 3, 32, 32>}, {pipeline_mode = #tpu.pipeline_mode<synchronous>, transform_indices = @transform_6, window_bounds = array<i64: 3, 32, 32>}, {pipeline_mode = #tpu.pipeline_mode<synchronous>, transform_indices = @transform_7, window_bounds = array<i64: 3, 1, 32>}, {pipeline_mode = #tpu.pipeline_mode<synchronous>, transform_indices = @transform_8, window_bounds = array<i64: 3, 1, 32>}, {transform_indices = @transform_9, window_bounds = array<i64: 32, 128>}, {transform_indices = @transform_10, window_bounds = array<i64: 32, 128>}, {transform_indices = @transform_11, window_bounds = array<i64: 1, 128>}, {transform_indices = @transform_12, window_bounds = array<i64: 2, 128>}, {pipeline_mode = #tpu.pipeline_mode<synchronous>, transform_indices = @transform_13, window_bounds = array<i64: 2, 1>}, {pipeline_mode = #tpu.pipeline_mode<synchronous>, transform_indices = @transform_14, window_bounds = array<i64: 2, 32>}]} {
    %c0_i32 = arith.constant 0 : i32
    %0 = arith.cmpi eq, %arg0, %c0_i32 : i32
    %1 = arith.extui %0 : i1 to i32
    %c0_i32_0 = arith.constant 0 : i32
    %2 = arith.cmpi ne, %1, %c0_i32_0 : i32
    scf.if %2 {
      %c0_25 = arith.constant 0 : index
      %33 = memref.load %arg1[%c0_25] : memref<2xi32, #tpu.memory_space<smem>>
      %c0_i32_26 = arith.constant 0 : i32
      %c0_i32_27 = arith.constant 0 : i32
      %34 = tpu.memref_slice %arg4[%33, %c0_i32_27] : memref<64x16xf32, #tpu.memory_space<any>> -> memref<1x16xf32, #tpu.memory_space<any>>
      %c0_i32_28 = arith.constant 0 : i32
      %c0_i32_29 = arith.constant 0 : i32
      %35 = tpu.memref_slice %arg16[%c0_i32_28, %c0_i32_29] : memref<2x16xf32, #tpu.memory_space<vmem>> -> memref<1x16xf32, #tpu.memory_space<vmem>>
      %36 = tpu.memref_slice %arg17[%c0_i32_26] : memref<2x!tpu.dma_semaphore, #tpu.memory_space<semaphore_mem>> -> memref<1x!tpu.dma_semaphore, #tpu.memory_space<semaphore_mem>>
      %37 = tpu.memref_squeeze %36 : memref<1x!tpu.dma_semaphore, #tpu.memory_space<semaphore_mem>> -> memref<!tpu.dma_semaphore, #tpu.memory_space<semaphore_mem>>
      tpu.enqueue_dma source(%34 : memref<1x16xf32, #tpu.memory_space<any>>) target(%35 : memref<1x16xf32, #tpu.memory_space<vmem>>) target_semaphore(%37 : memref<!tpu.dma_semaphore, #tpu.memory_space<semaphore_mem>>)
      %c1 = arith.constant 1 : index
      %38 = memref.load %arg1[%c1] : memref<2xi32, #tpu.memory_space<smem>>
      %c1_i32 = arith.constant 1 : i32
      %c0_i32_30 = arith.constant 0 : i32
      %39 = tpu.memref_slice %arg4[%38, %c0_i32_30] : memref<64x16xf32, #tpu.memory_space<any>> -> memref<1x16xf32, #tpu.memory_space<any>>
      %c1_i32_31 = arith.constant 1 : i32
      %c0_i32_32 = arith.constant 0 : i32
      %40 = tpu.memref_slice %arg16[%c1_i32_31, %c0_i32_32] : memref<2x16xf32, #tpu.memory_space<vmem>> -> memref<1x16xf32, #tpu.memory_space<vmem>>
      %41 = tpu.memref_slice %arg17[%c1_i32] : memref<2x!tpu.dma_semaphore, #tpu.memory_space<semaphore_mem>> -> memref<1x!tpu.dma_semaphore, #tpu.memory_space<semaphore_mem>>
      %42 = tpu.memref_squeeze %41 : memref<1x!tpu.dma_semaphore, #tpu.memory_space<semaphore_mem>> -> memref<!tpu.dma_semaphore, #tpu.memory_space<semaphore_mem>>
      tpu.enqueue_dma source(%39 : memref<1x16xf32, #tpu.memory_space<any>>) target(%40 : memref<1x16xf32, #tpu.memory_space<vmem>>) target_semaphore(%42 : memref<!tpu.dma_semaphore, #tpu.memory_space<semaphore_mem>>)
      %c0_i32_33 = arith.constant 0 : i32
      %c0_i32_34 = arith.constant 0 : i32
      %43 = tpu.memref_slice %arg4[%33, %c0_i32_34] : memref<64x16xf32, #tpu.memory_space<any>> -> memref<1x16xf32, #tpu.memory_space<any>>
      %c0_i32_35 = arith.constant 0 : i32
      %c0_i32_36 = arith.constant 0 : i32
      %44 = tpu.memref_slice %arg16[%c0_i32_35, %c0_i32_36] : memref<2x16xf32, #tpu.memory_space<vmem>> -> memref<1x16xf32, #tpu.memory_space<vmem>>
      %45 = tpu.memref_slice %arg17[%c0_i32_33] : memref<2x!tpu.dma_semaphore, #tpu.memory_space<semaphore_mem>> -> memref<1x!tpu.dma_semaphore, #tpu.memory_space<semaphore_mem>>
      %46 = tpu.memref_squeeze %45 : memref<1x!tpu.dma_semaphore, #tpu.memory_space<semaphore_mem>> -> memref<!tpu.dma_semaphore, #tpu.memory_space<semaphore_mem>>
      tpu.wait_dma2 semaphore(%46 : memref<!tpu.dma_semaphore, #tpu.memory_space<semaphore_mem>>) src(%43 : memref<1x16xf32, #tpu.memory_space<any>>) dst(%44 : memref<1x16xf32, #tpu.memory_space<vmem>>)
      %c1_i32_37 = arith.constant 1 : i32
      %c0_i32_38 = arith.constant 0 : i32
      %47 = tpu.memref_slice %arg4[%38, %c0_i32_38] : memref<64x16xf32, #tpu.memory_space<any>> -> memref<1x16xf32, #tpu.memory_space<any>>
      %c1_i32_39 = arith.constant 1 : i32
      %c0_i32_40 = arith.constant 0 : i32
      %48 = tpu.memref_slice %arg16[%c1_i32_39, %c0_i32_40] : memref<2x16xf32, #tpu.memory_space<vmem>> -> memref<1x16xf32, #tpu.memory_space<vmem>>
      %49 = tpu.memref_slice %arg17[%c1_i32_37] : memref<2x!tpu.dma_semaphore, #tpu.memory_space<semaphore_mem>> -> memref<1x!tpu.dma_semaphore, #tpu.memory_space<semaphore_mem>>
      %50 = tpu.memref_squeeze %49 : memref<1x!tpu.dma_semaphore, #tpu.memory_space<semaphore_mem>> -> memref<!tpu.dma_semaphore, #tpu.memory_space<semaphore_mem>>
      tpu.wait_dma2 semaphore(%50 : memref<!tpu.dma_semaphore, #tpu.memory_space<semaphore_mem>>) src(%47 : memref<1x16xf32, #tpu.memory_space<any>>) dst(%48 : memref<1x16xf32, #tpu.memory_space<vmem>>)
      %c0_41 = arith.constant 0 : index
      %c0_42 = arith.constant 0 : index
      %51 = vector.load %arg2[%c0_41, %c0_42] : memref<2x32xf32, #tpu.memory_space<vmem>>, vector<2x32xf32>
      %c0_43 = arith.constant 0 : index
      %c0_44 = arith.constant 0 : index
      %c0_45 = arith.constant 0 : index
      %52 = vector.load %arg3[%c0_43, %c0_44, %c0_45] : memref<2x8x32xf32, #tpu.memory_space<vmem>>, vector<2x8x32xf32>
      %53 = vector.shape_cast %51 : vector<2x32xf32> to vector<2x1x32xf32>
      "tpu.trace_start"() <{level = 10 : i32, message = "bqh,bth->bqt"}> : () -> ()
      %cst_46 = arith.constant dense<0.000000e+00> : vector<2x1x8xf32>
      %54 = tpu.matmul %53, %52, %cst_46 {dimension_numbers = #tpu.dot_dimension_numbers<[2], [2], [1], [1], [0, 0, 0, 1, 1, 1], [0], [0]>} : vector<2x1x32xf32>, vector<2x8x32xf32>, vector<2x1x8xf32> -> vector<2x1x8xf32>
      "tpu.trace_stop"() : () -> ()
      %55 = vector.shape_cast %54 : vector<2x1x8xf32> to vector<2x8xf32>
      %cst_47 = arith.constant dense<0xFF800000> : vector<2xf32>
      %56 = vector.multi_reduction <maximumf>, %55, %cst_47 [1] : vector<2x8xf32> to vector<2xf32>
      %57 = vector.shape_cast %56 : vector<2xf32> to vector<2x1xf32>
      %58 = vector.broadcast %57 : vector<2x1xf32> to vector<2x8xf32>
      %59 = arith.subf %55, %58 : vector<2x8xf32>
      %60 = math.exp %59 : vector<2x8xf32>
      %cst_48 = arith.constant dense<0.000000e+00> : vector<2xf32>
      %61 = vector.multi_reduction <add>, %60, %cst_48 [1] : vector<2x8xf32> to vector<2xf32>
      %62 = vector.shape_cast %61 : vector<2xf32> to vector<2x1xf32>
      %63 = tpu.reciprocal %62 : vector<2x1xf32> -> vector<2x1xf32>
      %64 = vector.broadcast %63 : vector<2x1xf32> to vector<2x8xf32>
      %65 = arith.mulf %60, %64 : vector<2x8xf32>
      %66 = vector.shape_cast %65 : vector<2x8xf32> to vector<2x1x8xf32>
      "tpu.trace_start"() <{level = 10 : i32, message = "bqt,bth->bqh"}> : () -> ()
      %cst_49 = arith.constant dense<0.000000e+00> : vector<2x1x32xf32>
      %67 = tpu.matmul %66, %52, %cst_49 {dimension_numbers = #tpu.dot_dimension_numbers<[2], [1], [1], [2], [0, 0, 0, 1, 1, 2], [0], [0]>} : vector<2x1x8xf32>, vector<2x8x32xf32>, vector<2x1x32xf32> -> vector<2x1x32xf32>
      "tpu.trace_stop"() : () -> ()
      %68 = vector.shape_cast %67 : vector<2x1x32xf32> to vector<2x32xf32>
      %c0_50 = arith.constant 0 : index
      %c0_51 = arith.constant 0 : index
      %69 = vector.load %arg16[%c0_50, %c0_51] : memref<2x16xf32, #tpu.memory_space<vmem>>, vector<2x16xf32>
      %c0_52 = arith.constant 0 : index
      %c0_53 = arith.constant 0 : index
      %c0_54 = arith.constant 0 : index
      %70 = vector.load %arg5[%c0_52, %c0_53, %c0_54] : memref<3x16x32xf32, #tpu.memory_space<vmem>>, vector<1x16x32xf32>
      %71 = vector.shape_cast %70 : vector<1x16x32xf32> to vector<16x32xf32>
      %cst_55 = arith.constant dense<0.000000e+00> : vector<2x32xf32>
      %72 = tpu.matmul %69, %71, %cst_55 {dimension_numbers = #tpu.dot_dimension_numbers<[1], [0], [0], [1], [0, 0, 1, 1], [], []>} : vector<2x16xf32>, vector<16x32xf32>, vector<2x32xf32> -> vector<2x32xf32>
      %c0_56 = arith.constant 0 : index
      %c0_57 = arith.constant 0 : index
      %c0_58 = arith.constant 0 : index
      %73 = vector.load %arg6[%c0_56, %c0_57, %c0_58] : memref<3x32x32xf32, #tpu.memory_space<vmem>>, vector<1x32x32xf32>
      %74 = vector.shape_cast %73 : vector<1x32x32xf32> to vector<32x32xf32>
      %cst_59 = arith.constant dense<0.000000e+00> : vector<2x32xf32>
      %75 = tpu.matmul %68, %74, %cst_59 {dimension_numbers = #tpu.dot_dimension_numbers<[1], [0], [0], [1], [0, 0, 1, 1], [], []>} : vector<2x32xf32>, vector<32x32xf32>, vector<2x32xf32> -> vector<2x32xf32>
      %76 = arith.addf %72, %75 : vector<2x32xf32>
      %c0_60 = arith.constant 0 : index
      %c0_61 = arith.constant 0 : index
      %c0_62 = arith.constant 0 : index
      %77 = vector.load %arg8[%c0_60, %c0_61, %c0_62] : memref<3x1x32xf32, #tpu.memory_space<vmem>>, vector<1x1x32xf32>
      %78 = vector.shape_cast %77 : vector<1x1x32xf32> to vector<1x32xf32>
      %79 = vector.broadcast %78 : vector<1x32xf32> to vector<2x32xf32>
      %80 = arith.addf %76, %79 : vector<2x32xf32>
      %c0_63 = arith.constant 0 : index
      %c0_64 = arith.constant 0 : index
      %c0_65 = arith.constant 0 : index
      %81 = vector.load %arg7[%c0_63, %c0_64, %c0_65] : memref<3x32x32xf32, #tpu.memory_space<vmem>>, vector<1x32x32xf32>
      %82 = vector.shape_cast %81 : vector<1x32x32xf32> to vector<32x32xf32>
      %cst_66 = arith.constant dense<0.000000e+00> : vector<2x32xf32>
      %83 = tpu.matmul %51, %82, %cst_66 {dimension_numbers = #tpu.dot_dimension_numbers<[1], [0], [0], [1], [0, 0, 1, 1], [], []>} : vector<2x32xf32>, vector<32x32xf32>, vector<2x32xf32> -> vector<2x32xf32>
      %c0_67 = arith.constant 0 : index
      %c0_68 = arith.constant 0 : index
      %c0_69 = arith.constant 0 : index
      %84 = vector.load %arg9[%c0_67, %c0_68, %c0_69] : memref<3x1x32xf32, #tpu.memory_space<vmem>>, vector<1x1x32xf32>
      %85 = vector.shape_cast %84 : vector<1x1x32xf32> to vector<1x32xf32>
      %86 = vector.broadcast %85 : vector<1x32xf32> to vector<2x32xf32>
      %87 = arith.addf %83, %86 : vector<2x32xf32>
      %c1_70 = arith.constant 1 : index
      %c0_71 = arith.constant 0 : index
      %c0_72 = arith.constant 0 : index
      %88 = vector.load %arg5[%c1_70, %c0_71, %c0_72] : memref<3x16x32xf32, #tpu.memory_space<vmem>>, vector<1x16x32xf32>
      %89 = vector.shape_cast %88 : vector<1x16x32xf32> to vector<16x32xf32>
      %cst_73 = arith.constant dense<0.000000e+00> : vector<2x32xf32>
      %90 = tpu.matmul %69, %89, %cst_73 {dimension_numbers = #tpu.dot_dimension_numbers<[1], [0], [0], [1], [0, 0, 1, 1], [], []>} : vector<2x16xf32>, vector<16x32xf32>, vector<2x32xf32> -> vector<2x32xf32>
      %c1_74 = arith.constant 1 : index
      %c0_75 = arith.constant 0 : index
      %c0_76 = arith.constant 0 : index
      %91 = vector.load %arg6[%c1_74, %c0_75, %c0_76] : memref<3x32x32xf32, #tpu.memory_space<vmem>>, vector<1x32x32xf32>
      %92 = vector.shape_cast %91 : vector<1x32x32xf32> to vector<32x32xf32>
      %cst_77 = arith.constant dense<0.000000e+00> : vector<2x32xf32>
      %93 = tpu.matmul %68, %92, %cst_77 {dimension_numbers = #tpu.dot_dimension_numbers<[1], [0], [0], [1], [0, 0, 1, 1], [], []>} : vector<2x32xf32>, vector<32x32xf32>, vector<2x32xf32> -> vector<2x32xf32>
      %94 = arith.addf %90, %93 : vector<2x32xf32>
      %c1_78 = arith.constant 1 : index
      %c0_79 = arith.constant 0 : index
      %c0_80 = arith.constant 0 : index
      %95 = vector.load %arg8[%c1_78, %c0_79, %c0_80] : memref<3x1x32xf32, #tpu.memory_space<vmem>>, vector<1x1x32xf32>
      %96 = vector.shape_cast %95 : vector<1x1x32xf32> to vector<1x32xf32>
      %97 = vector.broadcast %96 : vector<1x32xf32> to vector<2x32xf32>
      %98 = arith.addf %94, %97 : vector<2x32xf32>
      %c1_81 = arith.constant 1 : index
      %c0_82 = arith.constant 0 : index
      %c0_83 = arith.constant 0 : index
      %99 = vector.load %arg7[%c1_81, %c0_82, %c0_83] : memref<3x32x32xf32, #tpu.memory_space<vmem>>, vector<1x32x32xf32>
      %100 = vector.shape_cast %99 : vector<1x32x32xf32> to vector<32x32xf32>
      %cst_84 = arith.constant dense<0.000000e+00> : vector<2x32xf32>
      %101 = tpu.matmul %51, %100, %cst_84 {dimension_numbers = #tpu.dot_dimension_numbers<[1], [0], [0], [1], [0, 0, 1, 1], [], []>} : vector<2x32xf32>, vector<32x32xf32>, vector<2x32xf32> -> vector<2x32xf32>
      %c1_85 = arith.constant 1 : index
      %c0_86 = arith.constant 0 : index
      %c0_87 = arith.constant 0 : index
      %102 = vector.load %arg9[%c1_85, %c0_86, %c0_87] : memref<3x1x32xf32, #tpu.memory_space<vmem>>, vector<1x1x32xf32>
      %103 = vector.shape_cast %102 : vector<1x1x32xf32> to vector<1x32xf32>
      %104 = vector.broadcast %103 : vector<1x32xf32> to vector<2x32xf32>
      %105 = arith.addf %101, %104 : vector<2x32xf32>
      %c2 = arith.constant 2 : index
      %c0_88 = arith.constant 0 : index
      %c0_89 = arith.constant 0 : index
      %106 = vector.load %arg5[%c2, %c0_88, %c0_89] : memref<3x16x32xf32, #tpu.memory_space<vmem>>, vector<1x16x32xf32>
      %107 = vector.shape_cast %106 : vector<1x16x32xf32> to vector<16x32xf32>
      %cst_90 = arith.constant dense<0.000000e+00> : vector<2x32xf32>
      %108 = tpu.matmul %69, %107, %cst_90 {dimension_numbers = #tpu.dot_dimension_numbers<[1], [0], [0], [1], [0, 0, 1, 1], [], []>} : vector<2x16xf32>, vector<16x32xf32>, vector<2x32xf32> -> vector<2x32xf32>
      %c2_91 = arith.constant 2 : index
      %c0_92 = arith.constant 0 : index
      %c0_93 = arith.constant 0 : index
      %109 = vector.load %arg6[%c2_91, %c0_92, %c0_93] : memref<3x32x32xf32, #tpu.memory_space<vmem>>, vector<1x32x32xf32>
      %110 = vector.shape_cast %109 : vector<1x32x32xf32> to vector<32x32xf32>
      %cst_94 = arith.constant dense<0.000000e+00> : vector<2x32xf32>
      %111 = tpu.matmul %68, %110, %cst_94 {dimension_numbers = #tpu.dot_dimension_numbers<[1], [0], [0], [1], [0, 0, 1, 1], [], []>} : vector<2x32xf32>, vector<32x32xf32>, vector<2x32xf32> -> vector<2x32xf32>
      %112 = arith.addf %108, %111 : vector<2x32xf32>
      %c2_95 = arith.constant 2 : index
      %c0_96 = arith.constant 0 : index
      %c0_97 = arith.constant 0 : index
      %113 = vector.load %arg8[%c2_95, %c0_96, %c0_97] : memref<3x1x32xf32, #tpu.memory_space<vmem>>, vector<1x1x32xf32>
      %114 = vector.shape_cast %113 : vector<1x1x32xf32> to vector<1x32xf32>
      %115 = vector.broadcast %114 : vector<1x32xf32> to vector<2x32xf32>
      %116 = arith.addf %112, %115 : vector<2x32xf32>
      %c2_98 = arith.constant 2 : index
      %c0_99 = arith.constant 0 : index
      %c0_100 = arith.constant 0 : index
      %117 = vector.load %arg7[%c2_98, %c0_99, %c0_100] : memref<3x32x32xf32, #tpu.memory_space<vmem>>, vector<1x32x32xf32>
      %118 = vector.shape_cast %117 : vector<1x32x32xf32> to vector<32x32xf32>
      %cst_101 = arith.constant dense<0.000000e+00> : vector<2x32xf32>
      %119 = tpu.matmul %51, %118, %cst_101 {dimension_numbers = #tpu.dot_dimension_numbers<[1], [0], [0], [1], [0, 0, 1, 1], [], []>} : vector<2x32xf32>, vector<32x32xf32>, vector<2x32xf32> -> vector<2x32xf32>
      %c2_102 = arith.constant 2 : index
      %c0_103 = arith.constant 0 : index
      %c0_104 = arith.constant 0 : index
      %120 = vector.load %arg9[%c2_102, %c0_103, %c0_104] : memref<3x1x32xf32, #tpu.memory_space<vmem>>, vector<1x1x32xf32>
      %121 = vector.shape_cast %120 : vector<1x1x32xf32> to vector<1x32xf32>
      %122 = vector.broadcast %121 : vector<1x32xf32> to vector<2x32xf32>
      %123 = arith.addf %119, %122 : vector<2x32xf32>
      %124 = arith.addf %80, %87 : vector<2x32xf32>
      %125 = arith.negf %124 : vector<2x32xf32>
      %126 = math.exp %125 : vector<2x32xf32>
      %cst_105 = arith.constant 1.000000e+00 : f32
      %127 = vector.broadcast %cst_105 : f32 to vector<2x32xf32>
      %128 = arith.addf %127, %126 : vector<2x32xf32>
      %129 = arith.divf %127, %128 : vector<2x32xf32>
      %130 = arith.addf %98, %105 : vector<2x32xf32>
      %131 = arith.negf %130 : vector<2x32xf32>
      %132 = math.exp %131 : vector<2x32xf32>
      %cst_106 = arith.constant 1.000000e+00 : f32
      %133 = vector.broadcast %cst_106 : f32 to vector<2x32xf32>
      %134 = arith.addf %133, %132 : vector<2x32xf32>
      %135 = arith.divf %133, %134 : vector<2x32xf32>
      %136 = arith.mulf %129, %123 : vector<2x32xf32>
      %137 = arith.addf %116, %136 : vector<2x32xf32>
      %138 = math.tanh %137 : vector<2x32xf32>
      %cst_107 = arith.constant 1.000000e+00 : f32
      %139 = vector.broadcast %cst_107 : f32 to vector<2x32xf32>
      %140 = arith.subf %139, %135 : vector<2x32xf32>
      %141 = arith.mulf %140, %138 : vector<2x32xf32>
      %142 = arith.mulf %135, %51 : vector<2x32xf32>
      %143 = arith.addf %141, %142 : vector<2x32xf32>
      %c0_108 = arith.constant 0 : index
      %c0_109 = arith.constant 0 : index
      %144 = vector.load %arg18[%c0_108, %c0_109] : memref<2x32xf32, #tpu.memory_space<vmem>>, vector<2x32xf32>
      tpu.vector_store %arg18[%c0_108, %c0_109], %143 {strides = array<i32>} : memref<2x32xf32, #tpu.memory_space<vmem>>, vector<2x32xf32>,
      %c0_110 = arith.constant 0 : index
      %c0_111 = arith.constant 0 : index
      %145 = vector.load %arg19[%c0_110, %c0_111] : memref<2x32xf32, #tpu.memory_space<vmem>>, vector<2x32xf32>
      tpu.vector_store %arg19[%c0_110, %c0_111], %68 {strides = array<i32>} : memref<2x32xf32, #tpu.memory_space<vmem>>, vector<2x32xf32>,
      %c0_112 = arith.constant 0 : index
      %c0_113 = arith.constant 0 : index
      %146 = vector.load %arg15[%c0_112, %c0_113] : memref<2x32xf32, #tpu.memory_space<vmem>>, vector<2x32xf32>
      tpu.vector_store %arg15[%c0_112, %c0_113], %143 {strides = array<i32>} : memref<2x32xf32, #tpu.memory_space<vmem>>, vector<2x32xf32>,
      %cst_114 = arith.constant 0xFF800000 : f32
      %147 = vector.broadcast %cst_114 : f32 to vector<2x1xf32>
      %c0_115 = arith.constant 0 : index
      %c0_116 = arith.constant 0 : index
      %148 = vector.load %arg20[%c0_115, %c0_116] : memref<2x1xf32, #tpu.memory_space<vmem>>, vector<2x1xf32>
      tpu.vector_store %arg20[%c0_115, %c0_116], %147 {strides = array<i32>} : memref<2x1xf32, #tpu.memory_space<vmem>>, vector<2x1xf32>,
      %cst_117 = arith.constant 0.000000e+00 : f32
      %149 = vector.broadcast %cst_117 : f32 to vector<2x1xf32>
      %c0_118 = arith.constant 0 : index
      %c0_119 = arith.constant 0 : index
      %150 = vector.load %arg21[%c0_118, %c0_119] : memref<2x1xf32, #tpu.memory_space<vmem>>, vector<2x1xf32>
      tpu.vector_store %arg21[%c0_118, %c0_119], %149 {strides = array<i32>} : memref<2x1xf32, #tpu.memory_space<vmem>>, vector<2x1xf32>,
    } else {
    }
    %c0 = arith.constant 0 : index
    %c0_1 = arith.constant 0 : index
    %3 = vector.load %arg18[%c0, %c0_1] : memref<2x32xf32, #tpu.memory_space<vmem>>, vector<2x32xf32>
    %c0_2 = arith.constant 0 : index
    %c0_3 = arith.constant 0 : index
    %4 = vector.load %arg10[%c0_2, %c0_3] : memref<32x128xf32, #tpu.memory_space<vmem>>, vector<32x128xf32>
    %cst = arith.constant dense<0.000000e+00> : vector<2x128xf32>
    %5 = tpu.matmul %3, %4, %cst {dimension_numbers = #tpu.dot_dimension_numbers<[1], [0], [0], [1], [0, 0, 1, 1], [], []>} : vector<2x32xf32>, vector<32x128xf32>, vector<2x128xf32> -> vector<2x128xf32>
    %c0_4 = arith.constant 0 : index
    %c0_5 = arith.constant 0 : index
    %6 = vector.load %arg19[%c0_4, %c0_5] : memref<2x32xf32, #tpu.memory_space<vmem>>, vector<2x32xf32>
    %c0_6 = arith.constant 0 : index
    %c0_7 = arith.constant 0 : index
    %7 = vector.load %arg11[%c0_6, %c0_7] : memref<32x128xf32, #tpu.memory_space<vmem>>, vector<32x128xf32>
    %cst_8 = arith.constant dense<0.000000e+00> : vector<2x128xf32>
    %8 = tpu.matmul %6, %7, %cst_8 {dimension_numbers = #tpu.dot_dimension_numbers<[1], [0], [0], [1], [0, 0, 1, 1], [], []>} : vector<2x32xf32>, vector<32x128xf32>, vector<2x128xf32> -> vector<2x128xf32>
    %9 = arith.addf %5, %8 : vector<2x128xf32>
    %c0_9 = arith.constant 0 : index
    %c0_10 = arith.constant 0 : index
    %10 = vector.load %arg12[%c0_9, %c0_10] : memref<1x128xf32, #tpu.memory_space<vmem>>, vector<1x128xf32>
    %11 = vector.broadcast %10 : vector<1x128xf32> to vector<2x128xf32>
    %12 = arith.addf %9, %11 : vector<2x128xf32>
    %c0_11 = arith.constant 0 : index
    %c0_12 = arith.constant 0 : index
    %13 = vector.load %arg13[%c0_11, %c0_12] : memref<2x128xf32, #tpu.memory_space<vmem>>, vector<2x128xf32>
    tpu.vector_store %arg13[%c0_11, %c0_12], %12 {strides = array<i32>} : memref<2x128xf32, #tpu.memory_space<vmem>>, vector<2x128xf32>,
    %c0_13 = arith.constant 0 : index
    %c0_14 = arith.constant 0 : index
    %14 = vector.load %arg20[%c0_13, %c0_14] : memref<2x1xf32, #tpu.memory_space<vmem>>, vector<2x1xf32>
    %cst_15 = arith.constant dense<0xFF800000> : vector<2xf32>
    %15 = vector.multi_reduction <maximumf>, %12, %cst_15 [1] : vector<2x128xf32> to vector<2xf32>
    %16 = vector.shape_cast %15 : vector<2xf32> to vector<2x1xf32>
    %17 = arith.maximumf %14, %16 : vector<2x1xf32>
    %c0_16 = arith.constant 0 : index
    %c0_17 = arith.constant 0 : index
    %18 = vector.load %arg21[%c0_16, %c0_17] : memref<2x1xf32, #tpu.memory_space<vmem>>, vector<2x1xf32>
    %19 = arith.subf %14, %17 : vector<2x1xf32>
    %20 = math.exp %19 : vector<2x1xf32>
    %21 = arith.mulf %18, %20 : vector<2x1xf32>
    %22 = vector.broadcast %17 : vector<2x1xf32> to vector<2x128xf32>
    %23 = arith.subf %12, %22 : vector<2x128xf32>
    %24 = math.exp %23 : vector<2x128xf32>
    %cst_18 = arith.constant dense<0.000000e+00> : vector<2xf32>
    %25 = vector.multi_reduction <add>, %24, %cst_18 [1] : vector<2x128xf32> to vector<2xf32>
    %26 = vector.shape_cast %25 : vector<2xf32> to vector<2x1xf32>
    %27 = arith.addf %21, %26 : vector<2x1xf32>
    %c0_19 = arith.constant 0 : index
    %c0_20 = arith.constant 0 : index
    %28 = vector.load %arg21[%c0_19, %c0_20] : memref<2x1xf32, #tpu.memory_space<vmem>>, vector<2x1xf32>
    tpu.vector_store %arg21[%c0_19, %c0_20], %27 {strides = array<i32>} : memref<2x1xf32, #tpu.memory_space<vmem>>, vector<2x1xf32>,
    %c0_21 = arith.constant 0 : index
    %c0_22 = arith.constant 0 : index
    %29 = vector.load %arg20[%c0_21, %c0_22] : memref<2x1xf32, #tpu.memory_space<vmem>>, vector<2x1xf32>
    tpu.vector_store %arg20[%c0_21, %c0_22], %17 {strides = array<i32>} : memref<2x1xf32, #tpu.memory_space<vmem>>, vector<2x1xf32>,
    %c0_i32_23 = arith.constant 0 : i32
    %30 = arith.cmpi eq, %arg0, %c0_i32_23 : i32
    %31 = arith.extui %30 : i1 to i32
    %c0_i32_24 = arith.constant 0 : i32
    %32 = arith.cmpi ne, %31, %c0_i32_24 : i32
    scf.if %32 {
      %c0_25 = arith.constant 0 : index
      %c0_26 = arith.constant 0 : index
      %33 = vector.load %arg20[%c0_25, %c0_26] : memref<2x1xf32, #tpu.memory_space<vmem>>, vector<2x1xf32>
      %c0_27 = arith.constant 0 : index
      %c0_28 = arith.constant 0 : index
      %34 = vector.load %arg21[%c0_27, %c0_28] : memref<2x1xf32, #tpu.memory_space<vmem>>, vector<2x1xf32>
      %35 = math.log %34 : vector<2x1xf32>
      %36 = arith.addf %33, %35 : vector<2x1xf32>
      %c0_29 = arith.constant 0 : index
      %c0_30 = arith.constant 0 : index
      %37 = vector.load %arg14[%c0_29, %c0_30] : memref<2x1xf32, #tpu.memory_space<vmem>>, vector<2x1xf32>
      tpu.vector_store %arg14[%c0_29, %c0_30], %36 {strides = array<i32>} : memref<2x1xf32, #tpu.memory_space<vmem>>, vector<2x1xf32>,
    } else {
    }
    return
  }
  func.func @transform_0(%arg0: i32) -> i32 {
    %c0_i32 = arith.constant 0 : i32
    %c0_i32_0 = arith.constant 0 : i32
    return %c0_i32 : i32
  }
  func.func @transform_1(%arg0: i32) -> (i32, i32) {
    %c0_i32 = arith.constant 0 : i32
    %c0_i32_0 = arith.constant 0 : i32
    %c0_i32_1 = arith.constant 0 : i32
    return %c0_i32, %c0_i32_0 : i32, i32
  }
  func.func @transform_2(%arg0: i32) -> (i32, i32, i32) {
    %c0_i32 = arith.constant 0 : i32
    %c0_i32_0 = arith.constant 0 : i32
    %c0_i32_1 = arith.constant 0 : i32
    %c0_i32_2 = arith.constant 0 : i32
    return %c0_i32, %c0_i32_0, %c0_i32_1 : i32, i32, i32
  }
  func.func @transform_4(%arg0: i32) -> (i32, i32, i32) {
    %c0_i32 = arith.constant 0 : i32
    %c0_i32_0 = arith.constant 0 : i32
    %c0_i32_1 = arith.constant 0 : i32
    %c0_i32_2 = arith.constant 0 : i32
    return %c0_i32, %c0_i32_0, %c0_i32_1 : i32, i32, i32
  }
  func.func @transform_5(%arg0: i32) -> (i32, i32, i32) {
    %c0_i32 = arith.constant 0 : i32
    %c0_i32_0 = arith.constant 0 : i32
    %c0_i32_1 = arith.constant 0 : i32
    %c0_i32_2 = arith.constant 0 : i32
    return %c0_i32, %c0_i32_0, %c0_i32_1 : i32, i32, i32
  }
  func.func @transform_6(%arg0: i32) -> (i32, i32, i32) {
    %c0_i32 = arith.constant 0 : i32
    %c0_i32_0 = arith.constant 0 : i32
    %c0_i32_1 = arith.constant 0 : i32
    %c0_i32_2 = arith.constant 0 : i32
    return %c0_i32, %c0_i32_0, %c0_i32_1 : i32, i32, i32
  }
  func.func @transform_7(%arg0: i32) -> (i32, i32, i32) {
    %c0_i32 = arith.constant 0 : i32
    %c0_i32_0 = arith.constant 0 : i32
    %c0_i32_1 = arith.constant 0 : i32
    %c0_i32_2 = arith.constant 0 : i32
    return %c0_i32, %c0_i32_0, %c0_i32_1 : i32, i32, i32
  }
  func.func @transform_8(%arg0: i32) -> (i32, i32, i32) {
    %c0_i32 = arith.constant 0 : i32
    %c0_i32_0 = arith.constant 0 : i32
    %c0_i32_1 = arith.constant 0 : i32
    %c0_i32_2 = arith.constant 0 : i32
    return %c0_i32, %c0_i32_0, %c0_i32_1 : i32, i32, i32
  }
  func.func @transform_9(%arg0: i32) -> (i32, i32) {
    %c0_i32 = arith.constant 0 : i32
    %c0_i32_0 = arith.constant 0 : i32
    return %c0_i32, %arg0 : i32, i32
  }
  func.func @transform_10(%arg0: i32) -> (i32, i32) {
    %c0_i32 = arith.constant 0 : i32
    %c0_i32_0 = arith.constant 0 : i32
    return %c0_i32, %arg0 : i32, i32
  }
  func.func @transform_11(%arg0: i32) -> (i32, i32) {
    %c0_i32 = arith.constant 0 : i32
    %c0_i32_0 = arith.constant 0 : i32
    return %c0_i32, %arg0 : i32, i32
  }
  func.func @transform_12(%arg0: i32) -> (i32, i32) {
    %c0_i32 = arith.constant 0 : i32
    %c0_i32_0 = arith.constant 0 : i32
    return %c0_i32, %arg0 : i32, i32
  }
  func.func @transform_13(%arg0: i32) -> (i32, i32) {
    %c0_i32 = arith.constant 0 : i32
    %c0_i32_0 = arith.constant 0 : i32
    %c0_i32_1 = arith.constant 0 : i32
    return %c0_i32, %c0_i32_0 : i32, i32
  }
  func.func @transform_14(%arg0: i32) -> (i32, i32) {
    %c0_i32 = arith.constant 0 : i32
    %c0_i32_0 = arith.constant 0 : i32
    %c0_i32_1 = arith.constant 0 : i32
    return %c0_i32, %c0_i32_0 : i32, i32
  }
}

</mosaic_0001>

<llo_original>
// kernel: tpu_custom_call.1
$region0: #{tpu_custom_call.1}
  #allocation0 [shape = 'u32[]', space=smem, size = 0x4, offset = 0x4, fixed_abs, tag = 'smem constant byte address 0x4 - core index']
  #allocation1 [shape = 'u32[144,128]{1,0:T(1,128)}', space=vmem, size = 0x12000, scoped, tag = 'internal scratch']
  #allocation2 [shape = 'f32[2,16]{1,0:T(2,128)}', space=vmem, size = 0x400, scoped, tag = 'scratch operand']
  #allocation3 [shape = 's32[2]{0}', space=sflag, size = 0x8, scoped, tag = 'scratch operand']
  #allocation4 [shape = 'f32[2,32]{1,0:T(2,128)}', space=vmem, size = 0x400, scoped, tag = 'scratch operand']
  #allocation5 [shape = 'f32[2,32]{1,0:T(2,128)}', space=vmem, size = 0x400, scoped, tag = 'scratch operand']
  #allocation6 [shape = 'f32[2,1]{1,0:T(2,128)}', space=vmem, size = 0x400, scoped, tag = 'scratch operand']
  #allocation7 [shape = 'f32[2,1]{1,0:T(2,128)}', space=vmem, size = 0x400, scoped, tag = 'scratch operand']
  #allocation22 [shape = 's32[]', space=sflag, size = 0x4, offset = 0, fixed_abs, tag = 'sflag constant byte address 0x0 - dummy sync flag']
  #allocation23 [shape = 's32[]', space=sflag, size = 0x4, offset = 0, fixed_abs, tag = 'sflag constant byte address 0x0 - dummy sync flag']
  %s0 = inlined_call_operand.vmem [shape: s32[2], index: 0, kind: input, shape index: {}]
  %s1 = inlined_call_operand.hbm [shape: f32[2,32], index: 1, kind: input, shape index: {}]
  %s2 = inlined_call_operand.hbm [shape: f32[2,8,32], index: 2, kind: input, shape index: {}]
  %s3 = inlined_call_operand.vmem [shape: f32[64,16], index: 3, kind: input, shape index: {}]
  %s4 = inlined_call_operand.vmem [shape: f32[3,16,32], index: 4, kind: input, shape index: {}]
  %s5 = inlined_call_operand.hbm [shape: f32[3,32,32], index: 5, kind: input, shape index: {}]
  %s6 = inlined_call_operand.hbm [shape: f32[3,32,32], index: 6, kind: input, shape index: {}]
  %s7 = inlined_call_operand.vmem [shape: f32[3,1,32], index: 7, kind: input, shape index: {}]
  %s8 = inlined_call_operand.vmem [shape: f32[3,1,32], index: 8, kind: input, shape index: {}]
  %s9 = inlined_call_operand.vmem [shape: f32[32,128], index: 9, kind: input, shape index: {}]
  %s10 = inlined_call_operand.hbm [shape: f32[32,128], index: 10, kind: input, shape index: {}]
  %s11 = inlined_call_operand.vmem [shape: f32[1,128], index: 11, kind: input, shape index: {}]
  %s12 = inlined_call_operand.hbm [shape: f32[2,128], index: 12, kind: output, shape index: {0}]
  %s13 = inlined_call_operand.vmem [shape: f32[2,1], index: 13, kind: output, shape index: {1}]
  %s14 = inlined_call_operand.hbm [shape: f32[2,32], index: 14, kind: output, shape index: {2}]
  %15 = xla_tuple %s12, %s13, %s14
  %s16 = sld [smem:[#allocation0]]
  $region162: #{tpu_custom_call.1} parent=0
    _
  %s18 = ssub.s32 1, %s16
  %s19 = scalar_select 0, %s18, %s16
  $region1: #{tpu_custom_call.1} parent=0
    #allocation8 [shape = 'u8[512]{0}', space=smem, size = 0x200, scoped, tag = 'input window, operand 0, single buffered']
    #allocation9 [shape = 's32[1]{0}', space=sflag, size = 0x4, scoped, tag = 'scoped memory for tpu_custom_call.1']
    #allocation10 [shape = 's32[1]{0}', space=sflag, size = 0x4, scoped, tag = 'scoped memory for tpu_custom_call.1']
    #allocation11 [shape = 's32[1]{0}', space=sflag, size = 0x4, scoped, tag = 'scoped memory for tpu_custom_call.1']
    #allocation12 [shape = 'u8[1024]{0}', space=vmem, size = 0x400, scoped, tag = 'input window, operand 1, single buffered']
    #allocation13 [shape = 'u8[8192]{0}', space=vmem, size = 0x2000, scoped, tag = 'input window, operand 2, single buffered']
    #allocation14 [shape = 's32[1]{0}', space=sflag, size = 0x4, scoped, tag = 'scoped memory for tpu_custom_call.1']
    #allocation15 [shape = 'u8[49152]{0}', space=vmem, size = 0xc000, scoped, tag = 'input window, operand 5, single buffered']
    #allocation16 [shape = 'u8[49152]{0}', space=vmem, size = 0xc000, scoped, tag = 'input window, operand 6, single buffered']
    #allocation17 [shape = 's32[1]{0}', space=sflag, size = 0x4, scoped, tag = 'scoped memory for tpu_custom_call.1']
    #allocation18 [shape = 'u8[16384]{0}', space=vmem, size = 0x4000, scoped, tag = 'input window, operand 10, single buffered']
    #allocation19 [shape = 'u8[1024]{0}', space=vmem, size = 0x400, scoped, tag = 'output window, operand 0, single buffered']
    #allocation20 [shape = 'u8[1024]{0}', space=vmem, size = 0x400, scoped, tag = 'output window, operand 2, single buffered']
    #allocation21 [shape = 's32[1]{0}', space=sflag, size = 0x4, scoped, tag = 'scoped memory for tpu_custom_call.1']
    %20 = vsyncpa [#allocation11], 0
    %21 = vsyncpa [#allocation9], 0
    %22 = vsyncpa [#allocation14], 0
    %23 = vsyncpa [#allocation17], 0
    %24 = vsyncpa [#allocation10], 0
    %25 = vsyncpa [#allocation21], 0
    // Predicated region
    $region2: #{tpu_custom_call.1} parent=1 // pred_check
      _
    $region3: #{tpu_custom_call.1} parent=1 // pred_check_branch
      %27 = sbr.rel (0) target = $region5
    $region4: #{tpu_custom_call.1} parent=1 // pred_region
      %s29 = ssub.s32 16, 16
      %30 = vsyncadd [#allocation11], %s29
      %s32 = sshll.u32 %s0, 4
      %s33 = int_to_ptr.vmem [resolvable:$true] %s32
      %35 = dma.vmem_to_smem %s33, 16, [#allocation8], [#allocation11]
    $region5: #{tpu_custom_call.1} parent=1 // pred_fallthru
      _
    // Predicated region
    $region6: #{tpu_custom_call.1} parent=1 // pred_check
      _
    $region7: #{tpu_custom_call.1} parent=1 // pred_check_branch
      %37 = sbr.rel (0) target = $region9
    $region8: #{tpu_custom_call.1} parent=1 // pred_region
      %s39 = ssub.s32 32, 32
      %40 = vsyncadd [#allocation9], %s39
      %s42 = sshll.u32 [#allocation12], 4
      %s43 = int_to_ptr.vmem [resolvable:$true] %s42
      %45 = dma.hbm_to_vmem [thread:$0]  %s1, 32, %s43, [#allocation9]
    $region9: #{tpu_custom_call.1} parent=1 // pred_fallthru
      _
    // Predicated region
    $region10: #{tpu_custom_call.1} parent=1 // pred_check
      _
    $region11: #{tpu_custom_call.1} parent=1 // pred_check_branch
      %47 = sbr.rel (0) target = $region13
    $region12: #{tpu_custom_call.1} parent=1 // pred_region
      %s49 = ssub.s32 256, 256
      %50 = vsyncadd [#allocation14], %s49
      %s51 = sshll.u32 [#allocation13], 4
      %s52 = int_to_ptr.vmem [resolvable:$true] %s51
      %57 = dma.hbm_to_vmem [thread:$0]  %s2, 256, %s52, [#allocation14], 128, 128, 8
    $region13: #{tpu_custom_call.1} parent=1 // pred_fallthru
      _
    // Predicated region
    $region14: #{tpu_custom_call.1} parent=1 // pred_check
      _
    $region15: #{tpu_custom_call.1} parent=1 // pred_check_branch
      %59 = sbr.rel (0) target = $region17
    $region16: #{tpu_custom_call.1} parent=1 // pred_region
      _
    $region17: #{tpu_custom_call.1} parent=1 // pred_fallthru
      _
    // Predicated region
    $region18: #{tpu_custom_call.1} parent=1 // pred_check
      _
    $region19: #{tpu_custom_call.1} parent=1 // pred_check_branch
      %61 = sbr.rel (0) target = $region21
    $region20: #{tpu_custom_call.1} parent=1 // pred_region
      %s63 = ssub.s32 1536, 1536
      %64 = vsyncadd [#allocation14], %s63
      %s65 = sshll.u32 [#allocation15], 4
      %s66 = int_to_ptr.vmem [resolvable:$true] %s65
      %71 = dma.hbm_to_vmem [thread:$0]  %s5, 1536, %s66, [#allocation14], 128, 128, 8
    $region21: #{tpu_custom_call.1} parent=1 // pred_fallthru
      _
    // Predicated region
    $region22: #{tpu_custom_call.1} parent=1 // pred_check
      _
    $region23: #{tpu_custom_call.1} parent=1 // pred_check_branch
      %73 = sbr.rel (0) target = $region25
    $region24: #{tpu_custom_call.1} parent=1 // pred_region
      %s75 = ssub.s32 1536, 1536
      %76 = vsyncadd [#allocation17], %s75
      %s77 = sshll.u32 [#allocation16], 4
      %s78 = int_to_ptr.vmem [resolvable:$true] %s77
      %83 = dma.hbm_to_vmem [thread:$0]  %s6, 1536, %s78, [#allocation17], 128, 128, 8
    $region25: #{tpu_custom_call.1} parent=1 // pred_fallthru
      _
    // Predicated region
    $region26: #{tpu_custom_call.1} parent=1 // pred_check
      _
    $region27: #{tpu_custom_call.1} parent=1 // pred_check_branch
      %85 = sbr.rel (0) target = $region29
    $region28: #{tpu_custom_call.1} parent=1 // pred_region
      _
    $region29: #{tpu_custom_call.1} parent=1 // pred_fallthru
      _
    // Predicated region
    $region30: #{tpu_custom_call.1} parent=1 // pred_check
      _
    $region31: #{tpu_custom_call.1} parent=1 // pred_check_branch
      %87 = sbr.rel (0) target = $region33
    $region32: #{tpu_custom_call.1} parent=1 // pred_region
      _
    $region33: #{tpu_custom_call.1} parent=1 // pred_fallthru
      _
    // Predicated region
    $region34: #{tpu_custom_call.1} parent=1 // pred_check
      _
    $region35: #{tpu_custom_call.1} parent=1 // pred_check_branch
      %89 = sbr.rel (0) target = $region37
    $region36: #{tpu_custom_call.1} parent=1 // pred_region
      _
    $region37: #{tpu_custom_call.1} parent=1 // pred_fallthru
      _
    // Predicated region
    $region38: #{tpu_custom_call.1} parent=1 // pred_check
      _
    $region39: #{tpu_custom_call.1} parent=1 // pred_check_branch
      %91 = sbr.rel (0) target = $region41
    $region40: #{tpu_custom_call.1} parent=1 // pred_region
      %s93 = ssub.s32 512, 512
      %94 = vsyncadd [#allocation17], %s93
      %s95 = sshll.u32 [#allocation18], 4
      %s96 = int_to_ptr.vmem [resolvable:$true] %s95
      %101 = dma.hbm_to_vmem [thread:$0]  %s10, 512, %s96, [#allocation17], 128, 128, 8
    $region41: #{tpu_custom_call.1} parent=1 // pred_fallthru
      _
    // Predicated region
    $region42: #{tpu_custom_call.1} parent=1 // pred_check
      _
    $region43: #{tpu_custom_call.1} parent=1 // pred_check_branch
      %103 = sbr.rel (0) target = $region45
    $region44: #{tpu_custom_call.1} parent=1 // pred_region
      _
    $region45: #{tpu_custom_call.1} parent=1 // pred_fallthru
      _
    // Predicated region
    $region46: #{tpu_custom_call.1} parent=1 // pred_check
      _
    $region47: #{tpu_custom_call.1} parent=1 // pred_check_branch
      %105 = sbr.rel (0) target = $region49
    $region48: #{tpu_custom_call.1} parent=1 // pred_region
      %106 = dma.done [#allocation11], 16
    $region49: #{tpu_custom_call.1} parent=1 // pred_fallthru
      _
    // Predicated region
    $region50: #{tpu_custom_call.1} parent=1 // pred_check
      _
    $region51: #{tpu_custom_call.1} parent=1 // pred_check_branch
      %108 = sbr.rel (0) target = $region53
    $region52: #{tpu_custom_call.1} parent=1 // pred_region
      %109 = dma.done [#allocation9], 32
    $region53: #{tpu_custom_call.1} parent=1 // pred_fallthru
      _
    // Predicated region
    $region54: #{tpu_custom_call.1} parent=1 // pred_check
      _
    $region55: #{tpu_custom_call.1} parent=1 // pred_check_branch
      %111 = sbr.rel (0) target = $region57
    $region56: #{tpu_custom_call.1} parent=1 // pred_region
      %112 = dma.done [#allocation14], 256
    $region57: #{tpu_custom_call.1} parent=1 // pred_fallthru
      _
    // Predicated region
    $region58: #{tpu_custom_call.1} parent=1 // pred_check
      _
    $region59: #{tpu_custom_call.1} parent=1 // pred_check_branch
      %114 = sbr.rel (0) target = $region61
    $region60: #{tpu_custom_call.1} parent=1 // pred_region
      %115 = dma.done [#allocation14], 1536
    $region61: #{tpu_custom_call.1} parent=1 // pred_fallthru
      _
    // Predicated region
    $region62: #{tpu_custom_call.1} parent=1 // pred_check
      _
    $region63: #{tpu_custom_call.1} parent=1 // pred_check_branch
      %117 = sbr.rel (0) target = $region65
    $region64: #{tpu_custom_call.1} parent=1 // pred_region
      %118 = dma.done [#allocation17], 1536
    $region65: #{tpu_custom_call.1} parent=1 // pred_fallthru
      _
    // Predicated region
    $region66: #{tpu_custom_call.1} parent=1 // pred_check
      _
    $region67: #{tpu_custom_call.1} parent=1 // pred_check_branch
      %120 = sbr.rel (0) target = $region69
    $region68: #{tpu_custom_call.1} parent=1 // pred_region
      %121 = dma.done [#allocation17], 512
    $region69: #{tpu_custom_call.1} parent=1 // pred_fallthru
      _
    %122 = sfence
    %p123 = scmp.eq.s32.totalorder 0, 0
    // Predicated region
    $region70: #{tpu_custom_call.1} parent=1 // pred_check
      %p124 = pneg %p123
    $region71: #{tpu_custom_call.1} parent=1 // pred_check_branch
      %126 = sbr.rel (%p124) target = $region73
    $region72: #{tpu_custom_call.1} parent=1 // pred_region
      %s127 = sld [smem:[#allocation8]]
      %s128 = scalar_lea.vmem %s3, %s127
      %p130 = scmp.lt.u32.totalorder 1, 8
      %p131 = pneg %p130
      // Predicated region
      $region74: #{tpu_custom_call.1} parent=72 // pred_check
        _
      $region75: #{tpu_custom_call.1} parent=72 // pred_check_branch
        %133 = sbr.rel (%p130) target = $region77
      $region76: #{tpu_custom_call.1} parent=72 // pred_region
        %s149 = sand.u32 1, 7
        %p150 = scmp.eq.s32.totalorder %s149, 0
        %p151 = pneg %p150
        // Predicated region
        $region89: #{tpu_custom_call.1} parent=76 // pred_check
          _
        $region90: #{tpu_custom_call.1} parent=76 // pred_check_branch
          %153 = sbr.rel (%p150) target = $region92
        $region91: #{tpu_custom_call.1} parent=76 // pred_region
          %s154 = sand.u32 1, 7
          %s155 = ssub.s32 1, %s154
          %s156 = scalar_lea.vmem %s128, %s155
          %s157 = ssub.s32 1, %s154
          %s158 = scalar_lea.vmem [#allocation2], %s157
          %s159 = sshll.u32 1, %s154
          %s160 = ssub.s32 %s159, 1
          loop: start=0, step=1, limit=1
          $region93: #{tpu_custom_call.1} parent=91 // loop_pre_header
            _
          $region94: #{tpu_custom_call.1} parent=91 // loop_header
            %s162 = sphi 0, %s166
            %p163 = scmp.ge.s32.totalorder %s162, 1
            %s167 = sphi %s156, %s156
            %s168 = sphi %s158, %s158
          $region95: #{tpu_custom_call.1} parent=91 // loop_header_branch
            %165 = sbr.rel (%p163) target = $region99
          $region96: #{tpu_custom_call.1} parent=91 // loop_body
            %v169 = vld [vmem:[%s167] sm:%s160]
            %170 = vst [vmem:[%s168] sm:%s160] %v169
          $region97: #{tpu_custom_call.1} parent=91 // loop_footer
            %s166 = sadd.s32 1, %s162
          $region98: #{tpu_custom_call.1} parent=91 // loop_footer_branch
            %161 = sbr.rel target = $region94
          $region99: #{tpu_custom_call.1} parent=91 // loop_exit
            _
        $region92: #{tpu_custom_call.1} parent=76 // pred_fallthru
          _
      $region77: #{tpu_custom_call.1} parent=72 // pred_fallthru
        _
      // Predicated region
      $region78: #{tpu_custom_call.1} parent=72 // pred_check
        %p134 = pneg %p130
      $region79: #{tpu_custom_call.1} parent=72 // pred_check_branch
        %136 = sbr.rel (%p134) target = $region81
      $region80: #{tpu_custom_call.1} parent=72 // pred_region
        %s137 = sshll.u32 1, 1
        %s138 = ssub.s32 %s137, 1
        loop: start=0, step=1, limit=1
        $region82: #{tpu_custom_call.1} parent=80 // loop_pre_header
          _
        $region83: #{tpu_custom_call.1} parent=80 // loop_header
          %s140 = sphi 0, %s144
          %p141 = scmp.ge.s32.totalorder %s140, 1
          %s145 = sphi %s128, %s128
          %s146 = sphi [#allocation2], [#allocation2]
        $region84: #{tpu_custom_call.1} parent=80 // loop_header_branch
          %143 = sbr.rel (%p141) target = $region88
        $region85: #{tpu_custom_call.1} parent=80 // loop_body
          %v147 = vld [vmem:[%s145] sm:%s138]
          %148 = vst [vmem:[%s146] sm:%s138] %v147
        $region86: #{tpu_custom_call.1} parent=80 // loop_footer
          %s144 = sadd.s32 1, %s140
        $region87: #{tpu_custom_call.1} parent=80 // loop_footer_branch
          %139 = sbr.rel target = $region83
        $region88: #{tpu_custom_call.1} parent=80 // loop_exit
          _
      $region81: #{tpu_custom_call.1} parent=72 // pred_fallthru
        _
      // Predicated region
      $region100: #{tpu_custom_call.1} parent=72 // pred_check
        _
      $region101: #{tpu_custom_call.1} parent=72 // pred_check_branch
        %173 = sbr.rel (0) target = $region103
      $region102: #{tpu_custom_call.1} parent=72 // pred_region
        %174 = vsyncadd [#allocation3], 16
      $region103: #{tpu_custom_call.1} parent=72 // pred_fallthru
        _
      %s175 = sld [smem:[#allocation8 + $0x1]]
      %s176 = scalar_lea.vmem %s3, %s175
      %s177 = scalar_lea.vmem [#allocation2], 1
      %s178 = scalar_lea.sflag [#allocation3], 1
      %p180 = scmp.lt.u32.totalorder 1, 8
      %p181 = pneg %p180
      // Predicated region
      $region104: #{tpu_custom_call.1} parent=72 // pred_check
        _
      $region105: #{tpu_custom_call.1} parent=72 // pred_check_branch
        %183 = sbr.rel (%p180) target = $region107
      $region106: #{tpu_custom_call.1} parent=72 // pred_region
        %s199 = sand.u32 1, 7
        %p200 = scmp.eq.s32.totalorder %s199, 0
        %p201 = pneg %p200
        // Predicated region
        $region119: #{tpu_custom_call.1} parent=106 // pred_check
          _
        $region120: #{tpu_custom_call.1} parent=106 // pred_check_branch
          %203 = sbr.rel (%p200) target = $region122
        $region121: #{tpu_custom_call.1} parent=106 // pred_region
          %s204 = sand.u32 1, 7
          %s205 = ssub.s32 1, %s204
          %s206 = scalar_lea.vmem %s176, %s205
          %s207 = ssub.s32 1, %s204
          %s208 = scalar_lea.vmem %s177, %s207 [#allocation2]
          %s209 = sshll.u32 1, %s204
          %s210 = ssub.s32 %s209, 1
          loop: start=0, step=1, limit=1
          $region123: #{tpu_custom_call.1} parent=121 // loop_pre_header
            _
          $region124: #{tpu_custom_call.1} parent=121 // loop_header
            %s212 = sphi 0, %s216
            %p213 = scmp.ge.s32.totalorder %s212, 1
            %s217 = sphi %s206, %s206
            %s218 = sphi %s208, %s208
          $region125: #{tpu_custom_call.1} parent=121 // loop_header_branch
            %215 = sbr.rel (%p213) target = $region129
          $region126: #{tpu_custom_call.1} parent=121 // loop_body
            %v219 = vld [vmem:[%s217] sm:%s210]
            %220 = vst [vmem:[%s218] sm:%s210] %v219
          $region127: #{tpu_custom_call.1} parent=121 // loop_footer
            %s216 = sadd.s32 1, %s212
          $region128: #{tpu_custom_call.1} parent=121 // loop_footer_branch
            %211 = sbr.rel target = $region124
          $region129: #{tpu_custom_call.1} parent=121 // loop_exit
            _
        $region122: #{tpu_custom_call.1} parent=106 // pred_fallthru
          _
      $region107: #{tpu_custom_call.1} parent=72 // pred_fallthru
        _
      // Predicated region
      $region108: #{tpu_custom_call.1} parent=72 // pred_check
        %p184 = pneg %p180
      $region109: #{tpu_custom_call.1} parent=72 // pred_check_branch
        %186 = sbr.rel (%p184) target = $region111
      $region110: #{tpu_custom_call.1} parent=72 // pred_region
        %s187 = sshll.u32 1, 1
        %s188 = ssub.s32 %s187, 1
        loop: start=0, step=1, limit=1
        $region112: #{tpu_custom_call.1} parent=110 // loop_pre_header
          _
        $region113: #{tpu_custom_call.1} parent=110 // loop_header
          %s190 = sphi 0, %s194
          %p191 = scmp.ge.s32.totalorder %s190, 1
          %s195 = sphi %s176, %s176
          %s196 = sphi %s177, %s177
        $region114: #{tpu_custom_call.1} parent=110 // loop_header_branch
          %193 = sbr.rel (%p191) target = $region118
        $region115: #{tpu_custom_call.1} parent=110 // loop_body
          %v197 = vld [vmem:[%s195] sm:%s188]
          %198 = vst [vmem:[%s196] sm:%s188] %v197
        $region116: #{tpu_custom_call.1} parent=110 // loop_footer
          %s194 = sadd.s32 1, %s190
        $region117: #{tpu_custom_call.1} parent=110 // loop_footer_branch
          %189 = sbr.rel target = $region113
        $region118: #{tpu_custom_call.1} parent=110 // loop_exit
          _
      $region111: #{tpu_custom_call.1} parent=72 // pred_fallthru
        _
      // Predicated region
      $region130: #{tpu_custom_call.1} parent=72 // pred_check
        _
      $region131: #{tpu_custom_call.1} parent=72 // pred_check_branch
        %223 = sbr.rel (0) target = $region133
      $region132: #{tpu_custom_call.1} parent=72 // pred_region
        %224 = vsyncadd %s178, 16
      $region133: #{tpu_custom_call.1} parent=72 // pred_fallthru
        _
      %s225 = smul.u32 1, 1
      %s226 = sshll.u32 %s225, 4
      %227 = dma.done [#allocation3], %s226
      %s228 = sshll.u32 %s225, 4
      %229 = dma.done %s178, %s228
      %v230 = vld [vmem:[#allocation12] sm:$0x3]
      %v231 = vld [vmem:[#allocation13] sm:$0xff]
      %v232 = vld [vmem:[#allocation13 + $0x8] sm:$0xff]
      %v235 = vunpack.c.l.s4 1966171168
      %v236 = vunpack.c.0.s8 %v235
      %v237 = vlaneseq
      %v238 = vshrl.u32 %v237, 7
      %v239 = vsub.s32 %v236, %v238
      %v240 = vrot.slane %v230, %v239
      %v241 = vcombine.high %v240, %v240
      %v243 = vunpack.c.l.s4 1966171168
      %v244 = vunpack.c.0.s8 %v243
      %v245 = vlaneseq
      %v246 = vshrl.u32 %v245, 7
      %v247 = vsub.s32 %v244, %v246
      %v248 = vrot.slane %v240, %v247
      %v250 = vunpack.c.l.s4 1966171168
      %v251 = vunpack.c.0.s8 %v250
      %v252 = vlaneseq
      %v253 = vshrl.u32 %v252, 7
      %v254 = vsub.s32 %v251, %v253
      %v255 = vrot.slane %v241, %v254
      %vm256 = vcmask 261120
      %v257 = vsel %vm256, %v248, 0
      %v260 = vsel %vm256, %v231, 0
      %262 = vmatprep.subr.mxu0 0.0
      %263 = vmatpush1.xpose.msra.mxu0 0.0
      %264 = vmatprep.subr.mxu0 0.0
      %265 = vmatpush1.xpose.msra.mxu0 0.0
      %266 = vmatprep.subr.mxu0 0.0
      %267 = vmatpush1.xpose.msra.mxu0 0.0
      %268 = vmatprep.subr.mxu0 0.0
      %269 = vmatpush1.xpose.msra.mxu0 0.0
      %270 = vmatprep.subr.mxu0 0.0
      %271 = vmatpush1.xpose.msra.mxu0 0.0
      %272 = vmatprep.subr.mxu0 0.0
      %273 = vmatpush1.xpose.msra.mxu0 0.0
      %274 = vmatprep.subr.mxu0 0.0
      %275 = vmatpush1.xpose.msra.mxu0 0.0
      %276 = vmatprep.subr.mxu0 0.0
      %277 = vmatpush1.xpose.msra.mxu0 0.0
      %278 = vmatprep.subr.mxu0 0.0
      %279 = vmatpush1.xpose.msra.mxu0 0.0
      %280 = vmatprep.subr.mxu0 0.0
      %281 = vmatpush1.xpose.msra.mxu0 0.0
      %282 = vmatprep.subr.mxu0 0.0
      %283 = vmatpush1.xpose.msra.mxu0 0.0
      %284 = vmatprep.subr.mxu0 0.0
      %285 = vmatpush1.xpose.msra.mxu0 0.0
      %286 = vmatprep.subr.mxu0 0.0
      %287 = vmatpush1.xpose.msra.mxu0 0.0
      %288 = vmatprep.subr.mxu0 0.0
      %289 = vmatpush1.xpose.msra.mxu0 0.0
      %290 = vmatprep.subr.mxu0 0.0
      %291 = vmatpush1.xpose.msra.mxu0 0.0
      %292 = vmatprep.subr.mxu0 0.0
      %293 = vmatpush1.xpose.msra.mxu0 %v260
      %294 = vmatprep.subr.mxu0 0.0
      %295 = vmatpush2.xpose.msra.mxu0 0.0
      %296 = vmatprep.subr.mxu0 0.0
      %297 = vmatpush2.xpose.msra.mxu0 0.0
      %298 = vmatprep.subr.mxu0 0.0
      %299 = vmatpush2.xpose.msra.mxu0 0.0
      %300 = vmatprep.subr.mxu0 0.0
      %301 = vmatpush2.xpose.msra.mxu0 0.0
      %302 = vmatprep.subr.mxu0 0.0
      %303 = vmatpush2.xpose.msra.mxu0 0.0
      %304 = vmatprep.subr.mxu0 0.0
      %305 = vmatpush2.xpose.msra.mxu0 0.0
      %306 = vmatprep.subr.mxu0 0.0
      %307 = vmatpush2.xpose.msra.mxu0 0.0
      %308 = vmatprep.subr.mxu0 0.0
      %309 = vmatpush2.xpose.msra.mxu0 0.0
      %310 = vmatprep.subr.mxu0 0.0
      %311 = vmatpush2.xpose.msra.mxu0 0.0
      %312 = vmatprep.subr.mxu0 0.0
      %313 = vmatpush2.xpose.msra.mxu0 0.0
      %314 = vmatprep.subr.mxu0 0.0
      %315 = vmatpush2.xpose.msra.mxu0 0.0
      %316 = vmatprep.subr.mxu0 0.0
      %317 = vmatpush2.xpose.msra.mxu0 0.0
      %318 = vmatprep.subr.mxu0 0.0
      %319 = vmatpush2.xpose.msra.mxu0 0.0
      %320 = vmatprep.subr.mxu0 0.0
      %321 = vmatpush2.xpose.msra.mxu0 0.0
      %322 = vmatprep.subr.mxu0 0.0
      %323 = vmatpush2.xpose.msra.mxu0 0.0
      %324 = vmatprep.subr.mxu0 0.0
      %325 = vmatpush2.xpose.msra.mxu0 0.0
      %326 = vmatprep.mubr.f32.mxu0 0.0
      %327 = vmatmul.mubr.f32.gmra.mxu0 %v257
      %v328 = vpop.f32.mrf.mxu0
      %v329 = vadd.f32 0.0, %v328
      %v330 = vpop.f32.mrf.mxu0
      %331 = vdwg.mxu0
      %v332 = vsel %vm256, %v255, 0
      %v335 = vsel %vm256, %v232, 0
      %337 = vmatprep.subr.mxu0 0.0
      %338 = vmatpush1.xpose.msra.mxu0 0.0
      %339 = vmatprep.subr.mxu0 0.0
      %340 = vmatpush1.xpose.msra.mxu0 0.0
      %341 = vmatprep.subr.mxu0 0.0
      %342 = vmatpush1.xpose.msra.mxu0 0.0
      %343 = vmatprep.subr.mxu0 0.0
      %344 = vmatpush1.xpose.msra.mxu0 0.0
      %345 = vmatprep.subr.mxu0 0.0
      %346 = vmatpush1.xpose.msra.mxu0 0.0
      %347 = vmatprep.subr.mxu0 0.0
      %348 = vmatpush1.xpose.msra.mxu0 0.0
      %349 = vmatprep.subr.mxu0 0.0
      %350 = vmatpush1.xpose.msra.mxu0 0.0
      %351 = vmatprep.subr.mxu0 0.0
      %352 = vmatpush1.xpose.msra.mxu0 0.0
      %353 = vmatprep.subr.mxu0 0.0
      %354 = vmatpush1.xpose.msra.mxu0 0.0
      %355 = vmatprep.subr.mxu0 0.0
      %356 = vmatpush1.xpose.msra.mxu0 0.0
      %357 = vmatprep.subr.mxu0 0.0
      %358 = vmatpush1.xpose.msra.mxu0 0.0
      %359 = vmatprep.subr.mxu0 0.0
      %360 = vmatpush1.xpose.msra.mxu0 0.0
      %361 = vmatprep.subr.mxu0 0.0
      %362 = vmatpush1.xpose.msra.mxu0 0.0
      %363 = vmatprep.subr.mxu0 0.0
      %364 = vmatpush1.xpose.msra.mxu0 0.0
      %365 = vmatprep.subr.mxu0 0.0
      %366 = vmatpush1.xpose.msra.mxu0 0.0
      %367 = vmatprep.subr.mxu0 0.0
      %368 = vmatpush1.xpose.msra.mxu0 %v335
      %369 = vmatprep.subr.mxu0 0.0
      %370 = vmatpush2.xpose.msra.mxu0 0.0
      %371 = vmatprep.subr.mxu0 0.0
      %372 = vmatpush2.xpose.msra.mxu0 0.0
      %373 = vmatprep.subr.mxu0 0.0
      %374 = vmatpush2.xpose.msra.mxu0 0.0
      %375 = vmatprep.subr.mxu0 0.0
      %376 = vmatpush2.xpose.msra.mxu0 0.0
      %377 = vmatprep.subr.mxu0 0.0
      %378 = vmatpush2.xpose.msra.mxu0 0.0
      %379 = vmatprep.subr.mxu0 0.0
      %380 = vmatpush2.xpose.msra.mxu0 0.0
      %381 = vmatprep.subr.mxu0 0.0
      %382 = vmatpush2.xpose.msra.mxu0 0.0
      %383 = vmatprep.subr.mxu0 0.0
      %384 = vmatpush2.xpose.msra.mxu0 0.0
      %385 = vmatprep.subr.mxu0 0.0
      %386 = vmatpush2.xpose.msra.mxu0 0.0
      %387 = vmatprep.subr.mxu0 0.0
      %388 = vmatpush2.xpose.msra.mxu0 0.0
      %389 = vmatprep.subr.mxu0 0.0
      %390 = vmatpush2.xpose.msra.mxu0 0.0
      %391 = vmatprep.subr.mxu0 0.0
      %392 = vmatpush2.xpose.msra.mxu0 0.0
      %393 = vmatprep.subr.mxu0 0.0
      %394 = vmatpush2.xpose.msra.mxu0 0.0
      %395 = vmatprep.subr.mxu0 0.0
      %396 = vmatpush2.xpose.msra.mxu0 0.0
      %397 = vmatprep.subr.mxu0 0.0
      %398 = vmatpush2.xpose.msra.mxu0 0.0
      %399 = vmatprep.subr.mxu0 0.0
      %400 = vmatpush2.xpose.msra.mxu0 0.0
      %401 = vmatprep.mubr.f32.mxu0 0.0
      %402 = vmatmul.mubr.f32.gmra.mxu0 %v332
      %v403 = vpop.f32.mrf.mxu0
      %v404 = vadd.f32 0.0, %v403
      %v405 = vpop.f32.mrf.mxu0
      %406 = vdwg.mxu0
      %v409 = vrot.slane %v404, 7
      %vm410 = vcmask 1041409
      %v411 = vsel %vm410, %v409, %v329
      %vm413 = vcmask 58368
      %v414 = vsel %vm413, %v411, -inf
      %415 = vmax.xlane.f32.xlu0 %v414
      %v416 = vpop.xlane.xlu0 %415
      %v418 = vrot.slane %v416, 1
      %v421 = vsub.f32 %v329, %v416
      %v422 = vsub.f32 %v404, %v418
      %v423 = vmul.f32 %v421, 1.442695
      %v424 = vpow.pop %v423
      %v425 = vmul.f32 %v422, 1.442695
      %v426 = vpow.pop %v425
      %v429 = vrot.slane %v426, 7
      %v430 = vsel %vm410, %v429, %v424
      %v432 = vsel %vm413, %v430, 0.0
      %433 = vadd.xlane.f32.xlu0 %v432
      %v434 = vpop.xlane.xlu0 %433
      %v435 = vrcp.pop %v434
      %v437 = vrot.slane %v435, 1
      %v440 = vmul.f32 %v424, %v435
      %v441 = vmul.f32 %v426, %v437
      %vm442 = vcmask 64512
      %v444 = vsel %vm442, %v440, 0
      %446 = vmatprep.subr.mxu0 0.0
      %447 = vmatpush1.msra.mxu0 0.0
      %448 = vmatprep.subr.mxu0 0.0
      %449 = vmatpush1.msra.mxu0 0.0
      %450 = vmatprep.subr.mxu0 0.0
      %451 = vmatpush1.msra.mxu0 0.0
      %452 = vmatprep.subr.mxu0 0.0
      %453 = vmatpush1.msra.mxu0 0.0
      %454 = vmatprep.subr.mxu0 0.0
      %455 = vmatpush1.msra.mxu0 0.0
      %456 = vmatprep.subr.mxu0 0.0
      %457 = vmatpush1.msra.mxu0 0.0
      %458 = vmatprep.subr.mxu0 0.0
      %459 = vmatpush1.msra.mxu0 0.0
      %460 = vmatprep.subr.mxu0 0.0
      %461 = vmatpush1.msra.mxu0 0.0
      %462 = vmatprep.subr.mxu0 0.0
      %463 = vmatpush1.msra.mxu0 0.0
      %464 = vmatprep.subr.mxu0 0.0
      %465 = vmatpush1.msra.mxu0 0.0
      %466 = vmatprep.subr.mxu0 0.0
      %467 = vmatpush1.msra.mxu0 0.0
      %468 = vmatprep.subr.mxu0 0.0
      %469 = vmatpush1.msra.mxu0 0.0
      %470 = vmatprep.subr.mxu0 0.0
      %471 = vmatpush1.msra.mxu0 0.0
      %472 = vmatprep.subr.mxu0 0.0
      %473 = vmatpush1.msra.mxu0 0.0
      %474 = vmatprep.subr.mxu0 0.0
      %475 = vmatpush1.msra.mxu0 0.0
      %476 = vmatprep.subr.mxu0 0.0
      %477 = vmatpush1.msra.mxu0 %v231
      %478 = vmatprep.subr.mxu0 0.0
      %479 = vmatpush2.msra.mxu0 0.0
      %480 = vmatprep.subr.mxu0 0.0
      %481 = vmatpush2.msra.mxu0 0.0
      %482 = vmatprep.subr.mxu0 0.0
      %483 = vmatpush2.msra.mxu0 0.0
      %484 = vmatprep.subr.mxu0 0.0
      %485 = vmatpush2.msra.mxu0 0.0
      %486 = vmatprep.subr.mxu0 0.0
      %487 = vmatpush2.msra.mxu0 0.0
      %488 = vmatprep.subr.mxu0 0.0
      %489 = vmatpush2.msra.mxu0 0.0
      %490 = vmatprep.subr.mxu0 0.0
      %491 = vmatpush2.msra.mxu0 0.0
      %492 = vmatprep.subr.mxu0 0.0
      %493 = vmatpush2.msra.mxu0 0.0
      %494 = vmatprep.subr.mxu0 0.0
      %495 = vmatpush2.msra.mxu0 0.0
      %496 = vmatprep.subr.mxu0 0.0
      %497 = vmatpush2.msra.mxu0 0.0
      %498 = vmatprep.subr.mxu0 0.0
      %499 = vmatpush2.msra.mxu0 0.0
      %500 = vmatprep.subr.mxu0 0.0
      %501 = vmatpush2.msra.mxu0 0.0
      %502 = vmatprep.subr.mxu0 0.0
      %503 = vmatpush2.msra.mxu0 0.0
      %504 = vmatprep.subr.mxu0 0.0
      %505 = vmatpush2.msra.mxu0 0.0
      %506 = vmatprep.subr.mxu0 0.0
      %507 = vmatpush2.msra.mxu0 0.0
      %508 = vmatprep.subr.mxu0 0.0
      %509 = vmatpush2.msra.mxu0 0.0
      %510 = vmatprep.mubr.f32.mxu0 0.0
      %511 = vmatmul.mubr.f32.gmra.mxu0 %v444
      %v512 = vpop.f32.mrf.mxu0
      %v513 = vadd.f32 0.0, %v512
      %v514 = vpop.f32.mrf.mxu0
      %515 = vdwg.mxu0
      %v517 = vsel %vm442, %v441, 0
      %519 = vmatprep.subr.mxu0 0.0
      %520 = vmatpush1.msra.mxu0 0.0
      %521 = vmatprep.subr.mxu0 0.0
      %522 = vmatpush1.msra.mxu0 0.0
      %523 = vmatprep.subr.mxu0 0.0
      %524 = vmatpush1.msra.mxu0 0.0
      %525 = vmatprep.subr.mxu0 0.0
      %526 = vmatpush1.msra.mxu0 0.0
      %527 = vmatprep.subr.mxu0 0.0
      %528 = vmatpush1.msra.mxu0 0.0
      %529 = vmatprep.subr.mxu0 0.0
      %530 = vmatpush1.msra.mxu0 0.0
      %531 = vmatprep.subr.mxu0 0.0
      %532 = vmatpush1.msra.mxu0 0.0
      %533 = vmatprep.subr.mxu0 0.0
      %534 = vmatpush1.msra.mxu0 0.0
      %535 = vmatprep.subr.mxu0 0.0
      %536 = vmatpush1.msra.mxu0 0.0
      %537 = vmatprep.subr.mxu0 0.0
      %538 = vmatpush1.msra.mxu0 0.0
      %539 = vmatprep.subr.mxu0 0.0
      %540 = vmatpush1.msra.mxu0 0.0
      %541 = vmatprep.subr.mxu0 0.0
      %542 = vmatpush1.msra.mxu0 0.0
      %543 = vmatprep.subr.mxu0 0.0
      %544 = vmatpush1.msra.mxu0 0.0
      %545 = vmatprep.subr.mxu0 0.0
      %546 = vmatpush1.msra.mxu0 0.0
      %547 = vmatprep.subr.mxu0 0.0
      %548 = vmatpush1.msra.mxu0 0.0
      %549 = vmatprep.subr.mxu0 0.0
      %550 = vmatpush1.msra.mxu0 %v232
      %551 = vmatprep.subr.mxu0 0.0
      %552 = vmatpush2.msra.mxu0 0.0
      %553 = vmatprep.subr.mxu0 0.0
      %554 = vmatpush2.msra.mxu0 0.0
      %555 = vmatprep.subr.mxu0 0.0
      %556 = vmatpush2.msra.mxu0 0.0
      %557 = vmatprep.subr.mxu0 0.0
      %558 = vmatpush2.msra.mxu0 0.0
      %559 = vmatprep.subr.mxu0 0.0
      %560 = vmatpush2.msra.mxu0 0.0
      %561 = vmatprep.subr.mxu0 0.0
      %562 = vmatpush2.msra.mxu0 0.0
      %563 = vmatprep.subr.mxu0 0.0
      %564 = vmatpush2.msra.mxu0 0.0
      %565 = vmatprep.subr.mxu0 0.0
      %566 = vmatpush2.msra.mxu0 0.0
      %567 = vmatprep.subr.mxu0 0.0
      %568 = vmatpush2.msra.mxu0 0.0
      %569 = vmatprep.subr.mxu0 0.0
      %570 = vmatpush2.msra.mxu0 0.0
      %571 = vmatprep.subr.mxu0 0.0
      %572 = vmatpush2.msra.mxu0 0.0
      %573 = vmatprep.subr.mxu0 0.0
      %574 = vmatpush2.msra.mxu0 0.0
      %575 = vmatprep.subr.mxu0 0.0
      %576 = vmatpush2.msra.mxu0 0.0
      %577 = vmatprep.subr.mxu0 0.0
      %578 = vmatpush2.msra.mxu0 0.0
      %579 = vmatprep.subr.mxu0 0.0
      %580 = vmatpush2.msra.mxu0 0.0
      %581 = vmatprep.subr.mxu0 0.0
      %582 = vmatpush2.msra.mxu0 0.0
      %583 = vmatprep.mubr.f32.mxu0 0.0
      %584 = vmatmul.mubr.f32.gmra.mxu0 %v517
      %v585 = vpop.f32.mrf.mxu0
      %v586 = vadd.f32 0.0, %v585
      %v587 = vpop.f32.mrf.mxu0
      %588 = vdwg.mxu0
      %v589 = vld [vmem:[#allocation2] sm:$0x3]
      %v590 = vld [vmem:[%s4] sm:$0xff]
      %v591 = vld [vmem:[%s4 + $0x8] sm:$0xff]
      %v592 = vld [vmem:[#allocation15] sm:$0xff]
      %v593 = vld [vmem:[#allocation15 + $0x8] sm:$0xff]
      %v594 = vld [vmem:[#allocation15 + $0x10] sm:$0xff]
      %v595 = vld [vmem:[#allocation15 + $0x18] sm:$0xff]
      %v598 = vrot.slane %v586, 7
      %v599 = vsel %vm410, %v598, %v513
      %v600 = vsel %vm256, %v599, 0
      %602 = vmatprep.subr.mxu0 0.0
      %603 = vmatpush1.msra.mxu0 0.0
      %604 = vmatprep.subr.mxu0 0.0
      %605 = vmatpush1.msra.mxu0 0.0
      %606 = vmatprep.subr.mxu0 0.0
      %607 = vmatpush1.msra.mxu0 0.0
      %608 = vmatprep.subr.mxu0 0.0
      %609 = vmatpush1.msra.mxu0 0.0
      %610 = vmatprep.subr.mxu0 0.0
      %611 = vmatpush1.msra.mxu0 0.0
      %612 = vmatprep.subr.mxu0 0.0
      %613 = vmatpush1.msra.mxu0 0.0
      %614 = vmatprep.subr.mxu0 0.0
      %615 = vmatpush1.msra.mxu0 0.0
      %616 = vmatprep.subr.mxu0 0.0
      %617 = vmatpush1.msra.mxu0 0.0
      %618 = vmatprep.subr.mxu0 0.0
      %619 = vmatpush1.msra.mxu0 0.0
      %620 = vmatprep.subr.mxu0 0.0
      %621 = vmatpush1.msra.mxu0 0.0
      %622 = vmatprep.subr.mxu0 0.0
      %623 = vmatpush1.msra.mxu0 0.0
      %624 = vmatprep.subr.mxu0 0.0
      %625 = vmatpush1.msra.mxu0 0.0
      %626 = vmatprep.subr.mxu0 0.0
      %627 = vmatpush1.msra.mxu0 %v595
      %628 = vmatprep.subr.mxu0 0.0
      %629 = vmatpush1.msra.mxu0 %v594
      %630 = vmatprep.subr.mxu0 0.0
      %631 = vmatpush1.msra.mxu0 %v593
      %632 = vmatprep.subr.mxu0 0.0
      %633 = vmatpush1.msra.mxu0 %v592
      %634 = vmatprep.subr.mxu0 0.0
      %635 = vmatpush2.msra.mxu0 0.0
      %636 = vmatprep.subr.mxu0 0.0
      %637 = vmatpush2.msra.mxu0 0.0
      %638 = vmatprep.subr.mxu0 0.0
      %639 = vmatpush2.msra.mxu0 0.0
      %640 = vmatprep.subr.mxu0 0.0
      %641 = vmatpush2.msra.mxu0 0.0
      %642 = vmatprep.subr.mxu0 0.0
      %643 = vmatpush2.msra.mxu0 0.0
      %644 = vmatprep.subr.mxu0 0.0
      %645 = vmatpush2.msra.mxu0 0.0
      %646 = vmatprep.subr.mxu0 0.0
      %647 = vmatpush2.msra.mxu0 0.0
      %648 = vmatprep.subr.mxu0 0.0
      %649 = vmatpush2.msra.mxu0 0.0
      %650 = vmatprep.subr.mxu0 0.0
      %651 = vmatpush2.msra.mxu0 0.0
      %652 = vmatprep.subr.mxu0 0.0
      %653 = vmatpush2.msra.mxu0 0.0
      %654 = vmatprep.subr.mxu0 0.0
      %655 = vmatpush2.msra.mxu0 0.0
      %656 = vmatprep.subr.mxu0 0.0
      %657 = vmatpush2.msra.mxu0 0.0
      %658 = vmatprep.subr.mxu0 0.0
      %659 = vmatpush2.msra.mxu0 0.0
      %660 = vmatprep.subr.mxu0 0.0
      %661 = vmatpush2.msra.mxu0 0.0
      %662 = vmatprep.subr.mxu0 0.0
      %663 = vmatpush2.msra.mxu0 0.0
      %664 = vmatprep.subr.mxu0 0.0
      %665 = vmatpush2.msra.mxu0 0.0
      %666 = vmatprep.mubr.f32.mxu0 0.0
      %667 = vmatmul.mubr.f32.gmra.mxu0 %v600
      %v668 = vpop.f32.mrf.mxu0
      %v669 = vadd.f32 0.0, %v668
      %v670 = vpop.f32.mrf.mxu0
      %671 = vdwg.mxu0
      %vm672 = vcmask 130048
      %v674 = vsel %vm672, %v589, 0
      %676 = vmatprep.subr.mxu0 0.0
      %677 = vmatpush1.msra.mxu0 0.0
      %678 = vmatprep.subr.mxu0 0.0
      %679 = vmatpush1.msra.mxu0 0.0
      %680 = vmatprep.subr.mxu0 0.0
      %681 = vmatpush1.msra.mxu0 0.0
      %682 = vmatprep.subr.mxu0 0.0
      %683 = vmatpush1.msra.mxu0 0.0
      %684 = vmatprep.subr.mxu0 0.0
      %685 = vmatpush1.msra.mxu0 0.0
      %686 = vmatprep.subr.mxu0 0.0
      %687 = vmatpush1.msra.mxu0 0.0
      %688 = vmatprep.subr.mxu0 0.0
      %689 = vmatpush1.msra.mxu0 0.0
      %690 = vmatprep.subr.mxu0 0.0
      %691 = vmatpush1.msra.mxu0 0.0
      %692 = vmatprep.subr.mxu0 0.0
      %693 = vmatpush1.msra.mxu0 0.0
      %694 = vmatprep.subr.mxu0 0.0
      %695 = vmatpush1.msra.mxu0 0.0
      %696 = vmatprep.subr.mxu0 0.0
      %697 = vmatpush1.msra.mxu0 0.0
      %698 = vmatprep.subr.mxu0 0.0
      %699 = vmatpush1.msra.mxu0 0.0
      %700 = vmatprep.subr.mxu0 0.0
      %701 = vmatpush1.msra.mxu0 0.0
      %702 = vmatprep.subr.mxu0 0.0
      %703 = vmatpush1.msra.mxu0 0.0
      %704 = vmatprep.subr.mxu0 0.0
      %705 = vmatpush1.msra.mxu0 %v591
      %706 = vmatprep.subr.mxu0 0.0
      %707 = vmatpush1.msra.mxu0 %v590
      %708 = vmatprep.subr.mxu0 0.0
      %709 = vmatpush2.msra.mxu0 0.0
      %710 = vmatprep.subr.mxu0 0.0
      %711 = vmatpush2.msra.mxu0 0.0
      %712 = vmatprep.subr.mxu0 0.0
      %713 = vmatpush2.msra.mxu0 0.0
      %714 = vmatprep.subr.mxu0 0.0
      %715 = vmatpush2.msra.mxu0 0.0
      %716 = vmatprep.subr.mxu0 0.0
      %717 = vmatpush2.msra.mxu0 0.0
      %718 = vmatprep.subr.mxu0 0.0
      %719 = vmatpush2.msra.mxu0 0.0
      %720 = vmatprep.subr.mxu0 0.0
      %721 = vmatpush2.msra.mxu0 0.0
      %722 = vmatprep.subr.mxu0 0.0
      %723 = vmatpush2.msra.mxu0 0.0
      %724 = vmatprep.subr.mxu0 0.0
      %725 = vmatpush2.msra.mxu0 0.0
      %726 = vmatprep.subr.mxu0 0.0
      %727 = vmatpush2.msra.mxu0 0.0
      %728 = vmatprep.subr.mxu0 0.0
      %729 = vmatpush2.msra.mxu0 0.0
      %730 = vmatprep.subr.mxu0 0.0
      %731 = vmatpush2.msra.mxu0 0.0
      %732 = vmatprep.subr.mxu0 0.0
      %733 = vmatpush2.msra.mxu0 0.0
      %734 = vmatprep.subr.mxu0 0.0
      %735 = vmatpush2.msra.mxu0 0.0
      %736 = vmatprep.subr.mxu0 0.0
      %737 = vmatpush2.msra.mxu0 0.0
      %738 = vmatprep.subr.mxu0 0.0
      %739 = vmatpush2.msra.mxu0 0.0
      %740 = vmatprep.mubr.f32.mxu0 0.0
      %741 = vmatmul.mubr.f32.gmra.mxu0 %v674
      %v742 = vpop.f32.mrf.mxu0
      %v743 = vadd.f32 %v669, %v742
      %v744 = vpop.f32.mrf.mxu0
      %745 = vdwg.mxu0
      %v746 = vld [vmem:[%s7] sm:$0x1]
      %v748 = vlaneseq
      %v749 = vshrl.u32 %v748, 7
      %v750 = vsub.s32 0, %v749
      %v751 = vrot.slane %v746, %v750
      %v753 = vadd.f32 %v743, %v751
      %v754 = vld [vmem:[#allocation16] sm:$0xff]
      %v755 = vld [vmem:[#allocation16 + $0x8] sm:$0xff]
      %v756 = vld [vmem:[#allocation16 + $0x10] sm:$0xff]
      %v757 = vld [vmem:[#allocation16 + $0x18] sm:$0xff]
      %v758 = vld [vmem:[%s8] sm:$0x1]
      %v760 = vlaneseq
      %v761 = vshrl.u32 %v760, 7
      %v762 = vsub.s32 0, %v761
      %v763 = vrot.slane %v758, %v762
      %v765 = vsel %vm256, %v230, 0
      %767 = vmatprep.subr.mxu0 0.0
      %768 = vmatpush1.msra.mxu0 0.0
      %769 = vmatprep.subr.mxu0 0.0
      %770 = vmatpush1.msra.mxu0 0.0
      %771 = vmatprep.subr.mxu0 0.0
      %772 = vmatpush1.msra.mxu0 0.0
      %773 = vmatprep.subr.mxu0 0.0
      %774 = vmatpush1.msra.mxu0 0.0
      %775 = vmatprep.subr.mxu0 0.0
      %776 = vmatpush1.msra.mxu0 0.0
      %777 = vmatprep.subr.mxu0 0.0
      %778 = vmatpush1.msra.mxu0 0.0
      %779 = vmatprep.subr.mxu0 0.0
      %780 = vmatpush1.msra.mxu0 0.0
      %781 = vmatprep.subr.mxu0 0.0
      %782 = vmatpush1.msra.mxu0 0.0
      %783 = vmatprep.subr.mxu0 0.0
      %784 = vmatpush1.msra.mxu0 0.0
      %785 = vmatprep.subr.mxu0 0.0
      %786 = vmatpush1.msra.mxu0 0.0
      %787 = vmatprep.subr.mxu0 0.0
      %788 = vmatpush1.msra.mxu0 0.0
      %789 = vmatprep.subr.mxu0 0.0
      %790 = vmatpush1.msra.mxu0 0.0
      %791 = vmatprep.subr.mxu0 0.0
      %792 = vmatpush1.msra.mxu0 %v757
      %793 = vmatprep.subr.mxu0 0.0
      %794 = vmatpush1.msra.mxu0 %v756
      %795 = vmatprep.subr.mxu0 0.0
      %796 = vmatpush1.msra.mxu0 %v755
      %797 = vmatprep.subr.mxu0 0.0
      %798 = vmatpush1.msra.mxu0 %v754
      %799 = vmatprep.subr.mxu0 0.0
      %800 = vmatpush2.msra.mxu0 0.0
      %801 = vmatprep.subr.mxu0 0.0
      %802 = vmatpush2.msra.mxu0 0.0
      %803 = vmatprep.subr.mxu0 0.0
      %804 = vmatpush2.msra.mxu0 0.0
      %805 = vmatprep.subr.mxu0 0.0
      %806 = vmatpush2.msra.mxu0 0.0
      %807 = vmatprep.subr.mxu0 0.0
      %808 = vmatpush2.msra.mxu0 0.0
      %809 = vmatprep.subr.mxu0 0.0
      %810 = vmatpush2.msra.mxu0 0.0
      %811 = vmatprep.subr.mxu0 0.0
      %812 = vmatpush2.msra.mxu0 0.0
      %813 = vmatprep.subr.mxu0 0.0
      %814 = vmatpush2.msra.mxu0 0.0
      %815 = vmatprep.subr.mxu0 0.0
      %816 = vmatpush2.msra.mxu0 0.0
      %817 = vmatprep.subr.mxu0 0.0
      %818 = vmatpush2.msra.mxu0 0.0
      %819 = vmatprep.subr.mxu0 0.0
      %820 = vmatpush2.msra.mxu0 0.0
      %821 = vmatprep.subr.mxu0 0.0
      %822 = vmatpush2.msra.mxu0 0.0
      %823 = vmatprep.subr.mxu0 0.0
      %824 = vmatpush2.msra.mxu0 0.0
      %825 = vmatprep.subr.mxu0 0.0
      %826 = vmatpush2.msra.mxu0 0.0
      %827 = vmatprep.subr.mxu0 0.0
      %828 = vmatpush2.msra.mxu0 0.0
      %829 = vmatprep.subr.mxu0 0.0
      %830 = vmatpush2.msra.mxu0 0.0
      %831 = vmatprep.mubr.f32.mxu0 0.0
      %832 = vmatmul.mubr.f32.gmra.mxu0 %v765
      %v833 = vpop.f32.mrf.mxu0
      %v834 = vadd.f32 %v763, %v833
      %v835 = vpop.f32.mrf.mxu0
      %836 = vdwg.mxu0
      %s837 = scalar_lea.vmem %s4, 16
      %v838 = vld [vmem:[%s837] sm:$0xff]
      %v839 = vld [vmem:[%s837 + $0x8] sm:$0xff]
      %s840 = scalar_lea.vmem [#allocation15], 32
      %v841 = vld [vmem:[%s840] sm:$0xff]
      %v842 = vld [vmem:[%s840 + $0x8] sm:$0xff]
      %v843 = vld [vmem:[%s840 + $0x10] sm:$0xff]
      %v844 = vld [vmem:[%s840 + $0x18] sm:$0xff]
      %845 = vmatprep.subr.mxu0 0.0
      %846 = vmatpush1.msra.mxu0 0.0
      %847 = vmatprep.subr.mxu0 0.0
      %848 = vmatpush1.msra.mxu0 0.0
      %849 = vmatprep.subr.mxu0 0.0
      %850 = vmatpush1.msra.mxu0 0.0
      %851 = vmatprep.subr.mxu0 0.0
      %852 = vmatpush1.msra.mxu0 0.0
      %853 = vmatprep.subr.mxu0 0.0
      %854 = vmatpush1.msra.mxu0 0.0
      %855 = vmatprep.subr.mxu0 0.0
      %856 = vmatpush1.msra.mxu0 0.0
      %857 = vmatprep.subr.mxu0 0.0
      %858 = vmatpush1.msra.mxu0 0.0
      %859 = vmatprep.subr.mxu0 0.0
      %860 = vmatpush1.msra.mxu0 0.0
      %861 = vmatprep.subr.mxu0 0.0
      %862 = vmatpush1.msra.mxu0 0.0
      %863 = vmatprep.subr.mxu0 0.0
      %864 = vmatpush1.msra.mxu0 0.0
      %865 = vmatprep.subr.mxu0 0.0
      %866 = vmatpush1.msra.mxu0 0.0
      %867 = vmatprep.subr.mxu0 0.0
      %868 = vmatpush1.msra.mxu0 0.0
      %869 = vmatprep.subr.mxu0 0.0
      %870 = vmatpush1.msra.mxu0 %v844
      %871 = vmatprep.subr.mxu0 0.0
      %872 = vmatpush1.msra.mxu0 %v843
      %873 = vmatprep.subr.mxu0 0.0
      %874 = vmatpush1.msra.mxu0 %v842
      %875 = vmatprep.subr.mxu0 0.0
      %876 = vmatpush1.msra.mxu0 %v841
      %877 = vmatprep.subr.mxu0 0.0
      %878 = vmatpush2.msra.mxu0 0.0
      %879 = vmatprep.subr.mxu0 0.0
      %880 = vmatpush2.msra.mxu0 0.0
      %881 = vmatprep.subr.mxu0 0.0
      %882 = vmatpush2.msra.mxu0 0.0
      %883 = vmatprep.subr.mxu0 0.0
      %884 = vmatpush2.msra.mxu0 0.0
      %885 = vmatprep.subr.mxu0 0.0
      %886 = vmatpush2.msra.mxu0 0.0
      %887 = vmatprep.subr.mxu0 0.0
      %888 = vmatpush2.msra.mxu0 0.0
      %889 = vmatprep.subr.mxu0 0.0
      %890 = vmatpush2.msra.mxu0 0.0
      %891 = vmatprep.subr.mxu0 0.0
      %892 = vmatpush2.msra.mxu0 0.0
      %893 = vmatprep.subr.mxu0 0.0
      %894 = vmatpush2.msra.mxu0 0.0
      %895 = vmatprep.subr.mxu0 0.0
      %896 = vmatpush2.msra.mxu0 0.0
      %897 = vmatprep.subr.mxu0 0.0
      %898 = vmatpush2.msra.mxu0 0.0
      %899 = vmatprep.subr.mxu0 0.0
      %900 = vmatpush2.msra.mxu0 0.0
      %901 = vmatprep.subr.mxu0 0.0
      %902 = vmatpush2.msra.mxu0 0.0
      %903 = vmatprep.subr.mxu0 0.0
      %904 = vmatpush2.msra.mxu0 0.0
      %905 = vmatprep.subr.mxu0 0.0
      %906 = vmatpush2.msra.mxu0 0.0
      %907 = vmatprep.subr.mxu0 0.0
      %908 = vmatpush2.msra.mxu0 0.0
      %909 = vmatprep.mubr.f32.mxu0 0.0
      %910 = vmatmul.mubr.f32.gmra.mxu0 %v600
      %v911 = vpop.f32.mrf.mxu0
      %v912 = vadd.f32 0.0, %v911
      %v913 = vpop.f32.mrf.mxu0
      %914 = vdwg.mxu0
      %915 = vmatprep.subr.mxu0 0.0
      %916 = vmatpush1.msra.mxu0 0.0
      %917 = vmatprep.subr.mxu0 0.0
      %918 = vmatpush1.msra.mxu0 0.0
      %919 = vmatprep.subr.mxu0 0.0
      %920 = vmatpush1.msra.mxu0 0.0
      %921 = vmatprep.subr.mxu0 0.0
      %922 = vmatpush1.msra.mxu0 0.0
      %923 = vmatprep.subr.mxu0 0.0
      %924 = vmatpush1.msra.mxu0 0.0
      %925 = vmatprep.subr.mxu0 0.0
      %926 = vmatpush1.msra.mxu0 0.0
      %927 = vmatprep.subr.mxu0 0.0
      %928 = vmatpush1.msra.mxu0 0.0
      %929 = vmatprep.subr.mxu0 0.0
      %930 = vmatpush1.msra.mxu0 0.0
      %931 = vmatprep.subr.mxu0 0.0
      %932 = vmatpush1.msra.mxu0 0.0
      %933 = vmatprep.subr.mxu0 0.0
      %934 = vmatpush1.msra.mxu0 0.0
      %935 = vmatprep.subr.mxu0 0.0
      %936 = vmatpush1.msra.mxu0 0.0
      %937 = vmatprep.subr.mxu0 0.0
      %938 = vmatpush1.msra.mxu0 0.0
      %939 = vmatprep.subr.mxu0 0.0
      %940 = vmatpush1.msra.mxu0 0.0
      %941 = vmatprep.subr.mxu0 0.0
      %942 = vmatpush1.msra.mxu0 0.0
      %943 = vmatprep.subr.mxu0 0.0
      %944 = vmatpush1.msra.mxu0 %v839
      %945 = vmatprep.subr.mxu0 0.0
      %946 = vmatpush1.msra.mxu0 %v838
      %947 = vmatprep.subr.mxu0 0.0
      %948 = vmatpush2.msra.mxu0 0.0
      %949 = vmatprep.subr.mxu0 0.0
      %950 = vmatpush2.msra.mxu0 0.0
      %951 = vmatprep.subr.mxu0 0.0
      %952 = vmatpush2.msra.mxu0 0.0
      %953 = vmatprep.subr.mxu0 0.0
      %954 = vmatpush2.msra.mxu0 0.0
      %955 = vmatprep.subr.mxu0 0.0
      %956 = vmatpush2.msra.mxu0 0.0
      %957 = vmatprep.subr.mxu0 0.0
      %958 = vmatpush2.msra.mxu0 0.0
      %959 = vmatprep.subr.mxu0 0.0
      %960 = vmatpush2.msra.mxu0 0.0
      %961 = vmatprep.subr.mxu0 0.0
      %962 = vmatpush2.msra.mxu0 0.0
      %963 = vmatprep.subr.mxu0 0.0
      %964 = vmatpush2.msra.mxu0 0.0
      %965 = vmatprep.subr.mxu0 0.0
      %966 = vmatpush2.msra.mxu0 0.0
      %967 = vmatprep.subr.mxu0 0.0
      %968 = vmatpush2.msra.mxu0 0.0
      %969 = vmatprep.subr.mxu0 0.0
      %970 = vmatpush2.msra.mxu0 0.0
      %971 = vmatprep.subr.mxu0 0.0
      %972 = vmatpush2.msra.mxu0 0.0
      %973 = vmatprep.subr.mxu0 0.0
      %974 = vmatpush2.msra.mxu0 0.0
      %975 = vmatprep.subr.mxu0 0.0
      %976 = vmatpush2.msra.mxu0 0.0
      %977 = vmatprep.subr.mxu0 0.0
      %978 = vmatpush2.msra.mxu0 0.0
      %979 = vmatprep.mubr.f32.mxu0 0.0
      %980 = vmatmul.mubr.f32.gmra.mxu0 %v674
      %v981 = vpop.f32.mrf.mxu0
      %v982 = vadd.f32 %v912, %v981
      %v983 = vpop.f32.mrf.mxu0
      %984 = vdwg.mxu0
      %s985 = scalar_lea.vmem %s7, 1
      %v986 = vld [vmem:[%s985] sm:$0x1]
      %v988 = vlaneseq
      %v989 = vshrl.u32 %v988, 7
      %v990 = vsub.s32 0, %v989
      %v991 = vrot.slane %v986, %v990
      %v993 = vadd.f32 %v982, %v991
      %s994 = scalar_lea.vmem [#allocation16], 32
      %v995 = vld [vmem:[%s994] sm:$0xff]
      %v996 = vld [vmem:[%s994 + $0x8] sm:$0xff]
      %v997 = vld [vmem:[%s994 + $0x10] sm:$0xff]
      %v998 = vld [vmem:[%s994 + $0x18] sm:$0xff]
      %s999 = scalar_lea.vmem %s8, 1
      %v1000 = vld [vmem:[%s999] sm:$0x1]
      %v1002 = vlaneseq
      %v1003 = vshrl.u32 %v1002, 7
      %v1004 = vsub.s32 0, %v1003
      %v1005 = vrot.slane %v1000, %v1004
      %1007 = vmatprep.subr.mxu0 0.0
      %1008 = vmatpush1.msra.mxu0 0.0
      %1009 = vmatprep.subr.mxu0 0.0
      %1010 = vmatpush1.msra.mxu0 0.0
      %1011 = vmatprep.subr.mxu0 0.0
      %1012 = vmatpush1.msra.mxu0 0.0
      %1013 = vmatprep.subr.mxu0 0.0
      %1014 = vmatpush1.msra.mxu0 0.0
      %1015 = vmatprep.subr.mxu0 0.0
      %1016 = vmatpush1.msra.mxu0 0.0
      %1017 = vmatprep.subr.mxu0 0.0
      %1018 = vmatpush1.msra.mxu0 0.0
      %1019 = vmatprep.subr.mxu0 0.0
      %1020 = vmatpush1.msra.mxu0 0.0
      %1021 = vmatprep.subr.mxu0 0.0
      %1022 = vmatpush1.msra.mxu0 0.0
      %1023 = vmatprep.subr.mxu0 0.0
      %1024 = vmatpush1.msra.mxu0 0.0
      %1025 = vmatprep.subr.mxu0 0.0
      %1026 = vmatpush1.msra.mxu0 0.0
      %1027 = vmatprep.subr.mxu0 0.0
      %1028 = vmatpush1.msra.mxu0 0.0
      %1029 = vmatprep.subr.mxu0 0.0
      %1030 = vmatpush1.msra.mxu0 0.0
      %1031 = vmatprep.subr.mxu0 0.0
      %1032 = vmatpush1.msra.mxu0 %v998
      %1033 = vmatprep.subr.mxu0 0.0
      %1034 = vmatpush1.msra.mxu0 %v997
      %1035 = vmatprep.subr.mxu0 0.0
      %1036 = vmatpush1.msra.mxu0 %v996
      %1037 = vmatprep.subr.mxu0 0.0
      %1038 = vmatpush1.msra.mxu0 %v995
      %1039 = vmatprep.subr.mxu0 0.0
      %1040 = vmatpush2.msra.mxu0 0.0
      %1041 = vmatprep.subr.mxu0 0.0
      %1042 = vmatpush2.msra.mxu0 0.0
      %1043 = vmatprep.subr.mxu0 0.0
      %1044 = vmatpush2.msra.mxu0 0.0
      %1045 = vmatprep.subr.mxu0 0.0
      %1046 = vmatpush2.msra.mxu0 0.0
      %1047 = vmatprep.subr.mxu0 0.0
      %1048 = vmatpush2.msra.mxu0 0.0
      %1049 = vmatprep.subr.mxu0 0.0
      %1050 = vmatpush2.msra.mxu0 0.0
      %1051 = vmatprep.subr.mxu0 0.0
      %1052 = vmatpush2.msra.mxu0 0.0
      %1053 = vmatprep.subr.mxu0 0.0
      %1054 = vmatpush2.msra.mxu0 0.0
      %1055 = vmatprep.subr.mxu0 0.0
      %1056 = vmatpush2.msra.mxu0 0.0
      %1057 = vmatprep.subr.mxu0 0.0
      %1058 = vmatpush2.msra.mxu0 0.0
      %1059 = vmatprep.subr.mxu0 0.0
      %1060 = vmatpush2.msra.mxu0 0.0
      %1061 = vmatprep.subr.mxu0 0.0
      %1062 = vmatpush2.msra.mxu0 0.0
      %1063 = vmatprep.subr.mxu0 0.0
      %1064 = vmatpush2.msra.mxu0 0.0
      %1065 = vmatprep.subr.mxu0 0.0
      %1066 = vmatpush2.msra.mxu0 0.0
      %1067 = vmatprep.subr.mxu0 0.0
      %1068 = vmatpush2.msra.mxu0 0.0
      %1069 = vmatprep.subr.mxu0 0.0
      %1070 = vmatpush2.msra.mxu0 0.0
      %1071 = vmatprep.mubr.f32.mxu0 0.0
      %1072 = vmatmul.mubr.f32.gmra.mxu0 %v765
      %v1073 = vpop.f32.mrf.mxu0
      %v1074 = vadd.f32 %v1005, %v1073
      %v1075 = vpop.f32.mrf.mxu0
      %1076 = vdwg.mxu0
      %s1077 = scalar_lea.vmem %s4, 32
      %v1078 = vld [vmem:[%s1077] sm:$0xff]
      %v1079 = vld [vmem:[%s1077 + $0x8] sm:$0xff]
      %s1080 = scalar_lea.vmem [#allocation15], 64
      %v1081 = vld [vmem:[%s1080] sm:$0xff]
      %v1082 = vld [vmem:[%s1080 + $0x8] sm:$0xff]
      %v1083 = vld [vmem:[%s1080 + $0x10] sm:$0xff]
      %v1084 = vld [vmem:[%s1080 + $0x18] sm:$0xff]
      %1085 = vmatprep.subr.mxu0 0.0
      %1086 = vmatpush1.msra.mxu0 0.0
      %1087 = vmatprep.subr.mxu0 0.0
      %1088 = vmatpush1.msra.mxu0 0.0
      %1089 = vmatprep.subr.mxu0 0.0
      %1090 = vmatpush1.msra.mxu0 0.0
      %1091 = vmatprep.subr.mxu0 0.0
      %1092 = vmatpush1.msra.mxu0 0.0
      %1093 = vmatprep.subr.mxu0 0.0
      %1094 = vmatpush1.msra.mxu0 0.0
      %1095 = vmatprep.subr.mxu0 0.0
      %1096 = vmatpush1.msra.mxu0 0.0
      %1097 = vmatprep.subr.mxu0 0.0
      %1098 = vmatpush1.msra.mxu0 0.0
      %1099 = vmatprep.subr.mxu0 0.0
      %1100 = vmatpush1.msra.mxu0 0.0
      %1101 = vmatprep.subr.mxu0 0.0
      %1102 = vmatpush1.msra.mxu0 0.0
      %1103 = vmatprep.subr.mxu0 0.0
      %1104 = vmatpush1.msra.mxu0 0.0
      %1105 = vmatprep.subr.mxu0 0.0
      %1106 = vmatpush1.msra.mxu0 0.0
      %1107 = vmatprep.subr.mxu0 0.0
      %1108 = vmatpush1.msra.mxu0 0.0
      %1109 = vmatprep.subr.mxu0 0.0
      %1110 = vmatpush1.msra.mxu0 %v1084
      %1111 = vmatprep.subr.mxu0 0.0
      %1112 = vmatpush1.msra.mxu0 %v1083
      %1113 = vmatprep.subr.mxu0 0.0
      %1114 = vmatpush1.msra.mxu0 %v1082
      %1115 = vmatprep.subr.mxu0 0.0
      %1116 = vmatpush1.msra.mxu0 %v1081
      %1117 = vmatprep.subr.mxu0 0.0
      %1118 = vmatpush2.msra.mxu0 0.0
      %1119 = vmatprep.subr.mxu0 0.0
      %1120 = vmatpush2.msra.mxu0 0.0
      %1121 = vmatprep.subr.mxu0 0.0
      %1122 = vmatpush2.msra.mxu0 0.0
      %1123 = vmatprep.subr.mxu0 0.0
      %1124 = vmatpush2.msra.mxu0 0.0
      %1125 = vmatprep.subr.mxu0 0.0
      %1126 = vmatpush2.msra.mxu0 0.0
      %1127 = vmatprep.subr.mxu0 0.0
      %1128 = vmatpush2.msra.mxu0 0.0
      %1129 = vmatprep.subr.mxu0 0.0
      %1130 = vmatpush2.msra.mxu0 0.0
      %1131 = vmatprep.subr.mxu0 0.0
      %1132 = vmatpush2.msra.mxu0 0.0
      %1133 = vmatprep.subr.mxu0 0.0
      %1134 = vmatpush2.msra.mxu0 0.0
      %1135 = vmatprep.subr.mxu0 0.0
      %1136 = vmatpush2.msra.mxu0 0.0
      %1137 = vmatprep.subr.mxu0 0.0
      %1138 = vmatpush2.msra.mxu0 0.0
      %1139 = vmatprep.subr.mxu0 0.0
      %1140 = vmatpush2.msra.mxu0 0.0
      %1141 = vmatprep.subr.mxu0 0.0
      %1142 = vmatpush2.msra.mxu0 0.0
      %1143 = vmatprep.subr.mxu0 0.0
      %1144 = vmatpush2.msra.mxu0 0.0
      %1145 = vmatprep.subr.mxu0 0.0
      %1146 = vmatpush2.msra.mxu0 0.0
      %1147 = vmatprep.subr.mxu0 0.0
      %1148 = vmatpush2.msra.mxu0 0.0
      %1149 = vmatprep.mubr.f32.mxu0 0.0
      %1150 = vmatmul.mubr.f32.gmra.mxu0 %v600
      %v1151 = vpop.f32.mrf.mxu0
      %v1152 = vadd.f32 0.0, %v1151
      %v1153 = vpop.f32.mrf.mxu0
      %1154 = vdwg.mxu0
      %1155 = vmatprep.subr.mxu0 0.0
      %1156 = vmatpush1.msra.mxu0 0.0
      %1157 = vmatprep.subr.mxu0 0.0
      %1158 = vmatpush1.msra.mxu0 0.0
      %1159 = vmatprep.subr.mxu0 0.0
      %1160 = vmatpush1.msra.mxu0 0.0
      %1161 = vmatprep.subr.mxu0 0.0
      %1162 = vmatpush1.msra.mxu0 0.0
      %1163 = vmatprep.subr.mxu0 0.0
      %1164 = vmatpush1.msra.mxu0 0.0
      %1165 = vmatprep.subr.mxu0 0.0
      %1166 = vmatpush1.msra.mxu0 0.0
      %1167 = vmatprep.subr.mxu0 0.0
      %1168 = vmatpush1.msra.mxu0 0.0
      %1169 = vmatprep.subr.mxu0 0.0
      %1170 = vmatpush1.msra.mxu0 0.0
      %1171 = vmatprep.subr.mxu0 0.0
      %1172 = vmatpush1.msra.mxu0 0.0
      %1173 = vmatprep.subr.mxu0 0.0
      %1174 = vmatpush1.msra.mxu0 0.0
      %1175 = vmatprep.subr.mxu0 0.0
      %1176 = vmatpush1.msra.mxu0 0.0
      %1177 = vmatprep.subr.mxu0 0.0
      %1178 = vmatpush1.msra.mxu0 0.0
      %1179 = vmatprep.subr.mxu0 0.0
      %1180 = vmatpush1.msra.mxu0 0.0
      %1181 = vmatprep.subr.mxu0 0.0
      %1182 = vmatpush1.msra.mxu0 0.0
      %1183 = vmatprep.subr.mxu0 0.0
      %1184 = vmatpush1.msra.mxu0 %v1079
      %1185 = vmatprep.subr.mxu0 0.0
      %1186 = vmatpush1.msra.mxu0 %v1078
      %1187 = vmatprep.subr.mxu0 0.0
      %1188 = vmatpush2.msra.mxu0 0.0
      %1189 = vmatprep.subr.mxu0 0.0
      %1190 = vmatpush2.msra.mxu0 0.0
      %1191 = vmatprep.subr.mxu0 0.0
      %1192 = vmatpush2.msra.mxu0 0.0
      %1193 = vmatprep.subr.mxu0 0.0
      %1194 = vmatpush2.msra.mxu0 0.0
      %1195 = vmatprep.subr.mxu0 0.0
      %1196 = vmatpush2.msra.mxu0 0.0
      %1197 = vmatprep.subr.mxu0 0.0
      %1198 = vmatpush2.msra.mxu0 0.0
      %1199 = vmatprep.subr.mxu0 0.0
      %1200 = vmatpush2.msra.mxu0 0.0
      %1201 = vmatprep.subr.mxu0 0.0
      %1202 = vmatpush2.msra.mxu0 0.0
      %1203 = vmatprep.subr.mxu0 0.0
      %1204 = vmatpush2.msra.mxu0 0.0
      %1205 = vmatprep.subr.mxu0 0.0
      %1206 = vmatpush2.msra.mxu0 0.0
      %1207 = vmatprep.subr.mxu0 0.0
      %1208 = vmatpush2.msra.mxu0 0.0
      %1209 = vmatprep.subr.mxu0 0.0
      %1210 = vmatpush2.msra.mxu0 0.0
      %1211 = vmatprep.subr.mxu0 0.0
      %1212 = vmatpush2.msra.mxu0 0.0
      %1213 = vmatprep.subr.mxu0 0.0
      %1214 = vmatpush2.msra.mxu0 0.0
      %1215 = vmatprep.subr.mxu0 0.0
      %1216 = vmatpush2.msra.mxu0 0.0
      %1217 = vmatprep.subr.mxu0 0.0
      %1218 = vmatpush2.msra.mxu0 0.0
      %1219 = vmatprep.mubr.f32.mxu0 0.0
      %1220 = vmatmul.mubr.f32.gmra.mxu0 %v674
      %v1221 = vpop.f32.mrf.mxu0
      %v1222 = vadd.f32 %v1152, %v1221
      %v1223 = vpop.f32.mrf.mxu0
      %1224 = vdwg.mxu0
      %s1225 = scalar_lea.vmem %s7, 2
      %v1226 = vld [vmem:[%s1225] sm:$0x1]
      %v1228 = vlaneseq
      %v1229 = vshrl.u32 %v1228, 7
      %v1230 = vsub.s32 0, %v1229
      %v1231 = vrot.slane %v1226, %v1230
      %v1233 = vadd.f32 %v1222, %v1231
      %s1234 = scalar_lea.vmem [#allocation16], 64
      %v1235 = vld [vmem:[%s1234] sm:$0xff]
      %v1236 = vld [vmem:[%s1234 + $0x8] sm:$0xff]
      %v1237 = vld [vmem:[%s1234 + $0x10] sm:$0xff]
      %v1238 = vld [vmem:[%s1234 + $0x18] sm:$0xff]
      %s1239 = scalar_lea.vmem %s8, 2
      %v1240 = vld [vmem:[%s1239] sm:$0x1]
      %v1242 = vlaneseq
      %v1243 = vshrl.u32 %v1242, 7
      %v1244 = vsub.s32 0, %v1243
      %v1245 = vrot.slane %v1240, %v1244
      %1247 = vmatprep.subr.mxu0 0.0
      %1248 = vmatpush1.msra.mxu0 0.0
      %1249 = vmatprep.subr.mxu0 0.0
      %1250 = vmatpush1.msra.mxu0 0.0
      %1251 = vmatprep.subr.mxu0 0.0
      %1252 = vmatpush1.msra.mxu0 0.0
      %1253 = vmatprep.subr.mxu0 0.0
      %1254 = vmatpush1.msra.mxu0 0.0
      %1255 = vmatprep.subr.mxu0 0.0
      %1256 = vmatpush1.msra.mxu0 0.0
      %1257 = vmatprep.subr.mxu0 0.0
      %1258 = vmatpush1.msra.mxu0 0.0
      %1259 = vmatprep.subr.mxu0 0.0
      %1260 = vmatpush1.msra.mxu0 0.0
      %1261 = vmatprep.subr.mxu0 0.0
      %1262 = vmatpush1.msra.mxu0 0.0
      %1263 = vmatprep.subr.mxu0 0.0
      %1264 = vmatpush1.msra.mxu0 0.0
      %1265 = vmatprep.subr.mxu0 0.0
      %1266 = vmatpush1.msra.mxu0 0.0
      %1267 = vmatprep.subr.mxu0 0.0
      %1268 = vmatpush1.msra.mxu0 0.0
      %1269 = vmatprep.subr.mxu0 0.0
      %1270 = vmatpush1.msra.mxu0 0.0
      %1271 = vmatprep.subr.mxu0 0.0
      %1272 = vmatpush1.msra.mxu0 %v1238
      %1273 = vmatprep.subr.mxu0 0.0
      %1274 = vmatpush1.msra.mxu0 %v1237
      %1275 = vmatprep.subr.mxu0 0.0
      %1276 = vmatpush1.msra.mxu0 %v1236
      %1277 = vmatprep.subr.mxu0 0.0
      %1278 = vmatpush1.msra.mxu0 %v1235
      %1279 = vmatprep.subr.mxu0 0.0
      %1280 = vmatpush2.msra.mxu0 0.0
      %1281 = vmatprep.subr.mxu0 0.0
      %1282 = vmatpush2.msra.mxu0 0.0
      %1283 = vmatprep.subr.mxu0 0.0
      %1284 = vmatpush2.msra.mxu0 0.0
      %1285 = vmatprep.subr.mxu0 0.0
      %1286 = vmatpush2.msra.mxu0 0.0
      %1287 = vmatprep.subr.mxu0 0.0
      %1288 = vmatpush2.msra.mxu0 0.0
      %1289 = vmatprep.subr.mxu0 0.0
      %1290 = vmatpush2.msra.mxu0 0.0
      %1291 = vmatprep.subr.mxu0 0.0
      %1292 = vmatpush2.msra.mxu0 0.0
      %1293 = vmatprep.subr.mxu0 0.0
      %1294 = vmatpush2.msra.mxu0 0.0
      %1295 = vmatprep.subr.mxu0 0.0
      %1296 = vmatpush2.msra.mxu0 0.0
      %1297 = vmatprep.subr.mxu0 0.0
      %1298 = vmatpush2.msra.mxu0 0.0
      %1299 = vmatprep.subr.mxu0 0.0
      %1300 = vmatpush2.msra.mxu0 0.0
      %1301 = vmatprep.subr.mxu0 0.0
      %1302 = vmatpush2.msra.mxu0 0.0
      %1303 = vmatprep.subr.mxu0 0.0
      %1304 = vmatpush2.msra.mxu0 0.0
      %1305 = vmatprep.subr.mxu0 0.0
      %1306 = vmatpush2.msra.mxu0 0.0
      %1307 = vmatprep.subr.mxu0 0.0
      %1308 = vmatpush2.msra.mxu0 0.0
      %1309 = vmatprep.subr.mxu0 0.0
      %1310 = vmatpush2.msra.mxu0 0.0
      %1311 = vmatprep.mubr.f32.mxu0 0.0
      %1312 = vmatmul.mubr.f32.gmra.mxu0 %v765
      %v1313 = vpop.f32.mrf.mxu0
      %v1314 = vadd.f32 %v1245, %v1313
      %v1315 = vpop.f32.mrf.mxu0
      %1316 = vdwg.mxu0
      %v1317 = vadd.f32 %v753, %v834
      %v1318 = vxor.u32 %v1317, 2147483648
      %v1319 = vmul.f32 %v1318, 1.442695
      %v1320 = vpow.pop %v1319
      %v1321 = vadd.f32 %v1320, 1.0
      %v1322 = vrcp.pop %v1321
      %v1323 = vmul.f32 1.0, %v1322
      %v1324 = vadd.f32 %v993, %v1074
      %v1325 = vxor.u32 %v1324, 2147483648
      %v1326 = vmul.f32 %v1325, 1.442695
      %v1327 = vpow.pop %v1326
      %v1328 = vadd.f32 %v1327, 1.0
      %v1329 = vrcp.pop %v1328
      %v1330 = vmul.f32 1.0, %v1329
      %v1331 = vmul.f32 %v1323, %v1314
      %v1332 = vadd.f32 %v1233, %v1331
      %v1333 = vtanh.pop %v1332
      %v1334 = vsub.f32 1.0, %v1330
      %v1335 = vmul.f32 %v1334, %v1333
      %v1336 = vmul.f32 %v1330, %v230
      %v1337 = vadd.f32 %v1335, %v1336
      %vm1338 = vcmask 254976
      %1339 = vst.msk [vmem:[#allocation4] sm:$0x3] %vm1338, %v1337
      %1341 = vst.msk [vmem:[#allocation5] sm:$0x3] %vm1338, %v599
      %1342 = vst.msk [vmem:[#allocation20] sm:$0x3] %vm1338, %v1337
      %vm1343 = vcmask 1024
      %1344 = vst.msk [vmem:[#allocation6] sm:$0x3] %vm1343, -inf
      %1345 = vst.msk [vmem:[#allocation7] sm:$0x3] %vm1343, 0.0
    $region73: #{tpu_custom_call.1} parent=1 // pred_fallthru
      _
    %v1346 = vld [vmem:[#allocation4] sm:$0x3]
    %v1347 = vld [vmem:[%s9] sm:$0xff]
    %v1348 = vld [vmem:[%s9 + $0x8] sm:$0xff]
    %v1349 = vld [vmem:[%s9 + $0x10] sm:$0xff]
    %v1350 = vld [vmem:[%s9 + $0x18] sm:$0xff]
    %v1351 = vld [vmem:[#allocation5] sm:$0x3]
    %v1352 = vld [vmem:[#allocation18] sm:$0xff]
    %v1353 = vld [vmem:[#allocation18 + $0x8] sm:$0xff]
    %v1354 = vld [vmem:[#allocation18 + $0x10] sm:$0xff]
    %v1355 = vld [vmem:[#allocation18 + $0x18] sm:$0xff]
    %vm1356 = vcmask 261120
    %v1358 = vsel %vm1356, %v1351, 0
    %1360 = vmatprep.subr.mxu0 0.0
    %1361 = vmatpush1.msra.mxu0 0.0
    %1362 = vmatprep.subr.mxu0 0.0
    %1363 = vmatpush1.msra.mxu0 0.0
    %1364 = vmatprep.subr.mxu0 0.0
    %1365 = vmatpush1.msra.mxu0 0.0
    %1366 = vmatprep.subr.mxu0 0.0
    %1367 = vmatpush1.msra.mxu0 0.0
    %1368 = vmatprep.subr.mxu0 0.0
    %1369 = vmatpush1.msra.mxu0 0.0
    %1370 = vmatprep.subr.mxu0 0.0
    %1371 = vmatpush1.msra.mxu0 0.0
    %1372 = vmatprep.subr.mxu0 0.0
    %1373 = vmatpush1.msra.mxu0 0.0
    %1374 = vmatprep.subr.mxu0 0.0
    %1375 = vmatpush1.msra.mxu0 0.0
    %1376 = vmatprep.subr.mxu0 0.0
    %1377 = vmatpush1.msra.mxu0 0.0
    %1378 = vmatprep.subr.mxu0 0.0
    %1379 = vmatpush1.msra.mxu0 0.0
    %1380 = vmatprep.subr.mxu0 0.0
    %1381 = vmatpush1.msra.mxu0 0.0
    %1382 = vmatprep.subr.mxu0 0.0
    %1383 = vmatpush1.msra.mxu0 0.0
    %1384 = vmatprep.subr.mxu0 0.0
    %1385 = vmatpush1.msra.mxu0 %v1355
    %1386 = vmatprep.subr.mxu0 0.0
    %1387 = vmatpush1.msra.mxu0 %v1354
    %1388 = vmatprep.subr.mxu0 0.0
    %1389 = vmatpush1.msra.mxu0 %v1353
    %1390 = vmatprep.subr.mxu0 0.0
    %1391 = vmatpush1.msra.mxu0 %v1352
    %1392 = vmatprep.subr.mxu0 0.0
    %1393 = vmatpush2.msra.mxu0 0.0
    %1394 = vmatprep.subr.mxu0 0.0
    %1395 = vmatpush2.msra.mxu0 0.0
    %1396 = vmatprep.subr.mxu0 0.0
    %1397 = vmatpush2.msra.mxu0 0.0
    %1398 = vmatprep.subr.mxu0 0.0
    %1399 = vmatpush2.msra.mxu0 0.0
    %1400 = vmatprep.subr.mxu0 0.0
    %1401 = vmatpush2.msra.mxu0 0.0
    %1402 = vmatprep.subr.mxu0 0.0
    %1403 = vmatpush2.msra.mxu0 0.0
    %1404 = vmatprep.subr.mxu0 0.0
    %1405 = vmatpush2.msra.mxu0 0.0
    %1406 = vmatprep.subr.mxu0 0.0
    %1407 = vmatpush2.msra.mxu0 0.0
    %1408 = vmatprep.subr.mxu0 0.0
    %1409 = vmatpush2.msra.mxu0 0.0
    %1410 = vmatprep.subr.mxu0 0.0
    %1411 = vmatpush2.msra.mxu0 0.0
    %1412 = vmatprep.subr.mxu0 0.0
    %1413 = vmatpush2.msra.mxu0 0.0
    %1414 = vmatprep.subr.mxu0 0.0
    %1415 = vmatpush2.msra.mxu0 0.0
    %1416 = vmatprep.subr.mxu0 0.0
    %1417 = vmatpush2.msra.mxu0 0.0
    %1418 = vmatprep.subr.mxu0 0.0
    %1419 = vmatpush2.msra.mxu0 0.0
    %1420 = vmatprep.subr.mxu0 0.0
    %1421 = vmatpush2.msra.mxu0 0.0
    %1422 = vmatprep.subr.mxu0 0.0
    %1423 = vmatpush2.msra.mxu0 0.0
    %1424 = vmatprep.mubr.f32.mxu0 0.0
    %1425 = vmatmul.mubr.f32.gmra.mxu0 %v1358
    %v1426 = vpop.f32.mrf.mxu0
    %v1427 = vadd.f32 0.0, %v1426
    %v1428 = vpop.f32.mrf.mxu0
    %1429 = vdwg.mxu0
    %v1431 = vsel %vm1356, %v1346, 0
    %1433 = vmatprep.subr.mxu0 0.0
    %1434 = vmatpush1.msra.mxu0 0.0
    %1435 = vmatprep.subr.mxu0 0.0
    %1436 = vmatpush1.msra.mxu0 0.0
    %1437 = vmatprep.subr.mxu0 0.0
    %1438 = vmatpush1.msra.mxu0 0.0
    %1439 = vmatprep.subr.mxu0 0.0
    %1440 = vmatpush1.msra.mxu0 0.0
    %1441 = vmatprep.subr.mxu0 0.0
    %1442 = vmatpush1.msra.mxu0 0.0
    %1443 = vmatprep.subr.mxu0 0.0
    %1444 = vmatpush1.msra.mxu0 0.0
    %1445 = vmatprep.subr.mxu0 0.0
    %1446 = vmatpush1.msra.mxu0 0.0
    %1447 = vmatprep.subr.mxu0 0.0
    %1448 = vmatpush1.msra.mxu0 0.0
    %1449 = vmatprep.subr.mxu0 0.0
    %1450 = vmatpush1.msra.mxu0 0.0
    %1451 = vmatprep.subr.mxu0 0.0
    %1452 = vmatpush1.msra.mxu0 0.0
    %1453 = vmatprep.subr.mxu0 0.0
    %1454 = vmatpush1.msra.mxu0 0.0
    %1455 = vmatprep.subr.mxu0 0.0
    %1456 = vmatpush1.msra.mxu0 0.0
    %1457 = vmatprep.subr.mxu0 0.0
    %1458 = vmatpush1.msra.mxu0 %v1350
    %1459 = vmatprep.subr.mxu0 0.0
    %1460 = vmatpush1.msra.mxu0 %v1349
    %1461 = vmatprep.subr.mxu0 0.0
    %1462 = vmatpush1.msra.mxu0 %v1348
    %1463 = vmatprep.subr.mxu0 0.0
    %1464 = vmatpush1.msra.mxu0 %v1347
    %1465 = vmatprep.subr.mxu0 0.0
    %1466 = vmatpush2.msra.mxu0 0.0
    %1467 = vmatprep.subr.mxu0 0.0
    %1468 = vmatpush2.msra.mxu0 0.0
    %1469 = vmatprep.subr.mxu0 0.0
    %1470 = vmatpush2.msra.mxu0 0.0
    %1471 = vmatprep.subr.mxu0 0.0
    %1472 = vmatpush2.msra.mxu0 0.0
    %1473 = vmatprep.subr.mxu0 0.0
    %1474 = vmatpush2.msra.mxu0 0.0
    %1475 = vmatprep.subr.mxu0 0.0
    %1476 = vmatpush2.msra.mxu0 0.0
    %1477 = vmatprep.subr.mxu0 0.0
    %1478 = vmatpush2.msra.mxu0 0.0
    %1479 = vmatprep.subr.mxu0 0.0
    %1480 = vmatpush2.msra.mxu0 0.0
    %1481 = vmatprep.subr.mxu0 0.0
    %1482 = vmatpush2.msra.mxu0 0.0
    %1483 = vmatprep.subr.mxu0 0.0
    %1484 = vmatpush2.msra.mxu0 0.0
    %1485 = vmatprep.subr.mxu0 0.0
    %1486 = vmatpush2.msra.mxu0 0.0
    %1487 = vmatprep.subr.mxu0 0.0
    %1488 = vmatpush2.msra.mxu0 0.0
    %1489 = vmatprep.subr.mxu0 0.0
    %1490 = vmatpush2.msra.mxu0 0.0
    %1491 = vmatprep.subr.mxu0 0.0
    %1492 = vmatpush2.msra.mxu0 0.0
    %1493 = vmatprep.subr.mxu0 0.0
    %1494 = vmatpush2.msra.mxu0 0.0
    %1495 = vmatprep.subr.mxu0 0.0
    %1496 = vmatpush2.msra.mxu0 0.0
    %1497 = vmatprep.mubr.f32.mxu0 0.0
    %1498 = vmatmul.mubr.f32.gmra.mxu0 %v1431
    %v1499 = vpop.f32.mrf.mxu0
    %v1500 = vadd.f32 %v1427, %v1499
    %v1501 = vpop.f32.mrf.mxu0
    %1502 = vdwg.mxu0
    %v1503 = vld [vmem:[%s11] sm:$0x1]
    %v1505 = vlaneseq
    %v1506 = vshrl.u32 %v1505, 7
    %v1507 = vsub.s32 0, %v1506
    %v1508 = vrot.slane %v1503, %v1507
    %v1510 = vadd.f32 %v1500, %v1508
    %1511 = vst [vmem:[#allocation19] sm:$0x3] %v1510
    %v1512 = vld [vmem:[#allocation6] sm:$0x3]
    %vm1513 = vcmask 1041408
    %v1514 = vsel %vm1513, %v1510, -inf
    %1515 = vmax.xlane.f32.xlu0 %v1514
    %v1516 = vpop.xlane.xlu0 %1515
    %v1517 = vmax.f32 %v1512, %v1516
    %v1518 = vld [vmem:[#allocation7] sm:$0x3]
    %v1519 = vsub.f32 %v1512, %v1517
    %v1520 = vmul.f32 %v1519, 1.442695
    %v1521 = vpow.pop %v1520
    %v1522 = vmul.f32 %v1518, %v1521
    %1524 = vset.pattern.permute.xlu0 0
    %1525 = vperm.xlu0 %1524, %v1517
    %v1526 = vpop.permute.xlu0 %1525
    %v1528 = vsub.f32 %v1510, %v1526
    %v1529 = vmul.f32 %v1528, 1.442695
    %v1530 = vpow.pop %v1529
    %v1531 = vsel %vm1513, %v1530, 0.0
    %1532 = vadd.xlane.f32.xlu0 %v1531
    %v1533 = vpop.xlane.xlu0 %1532
    %v1534 = vadd.f32 %v1522, %v1533
    %vm1535 = vcmask 1024
    %1536 = vst.msk [vmem:[#allocation7] sm:$0x3] %vm1535, %v1534
    %1537 = vst.msk [vmem:[#allocation6] sm:$0x3] %vm1535, %v1517
    // Predicated region
    $region134: #{tpu_custom_call.1} parent=1 // pred_check
      %p1538 = pneg %p123
    $region135: #{tpu_custom_call.1} parent=1 // pred_check_branch
      %1540 = sbr.rel (%p1538) target = $region137
    $region136: #{tpu_custom_call.1} parent=1 // pred_region
      %v1541 = vld [vmem:[#allocation6] sm:$0x3]
      %v1542 = vld [vmem:[#allocation7] sm:$0x3]
      %v1543 = vlog2.pop %v1542
      %v1544 = vmul.f32 %v1543, 0.6931472
      %v1545 = vadd.f32 %v1541, %v1544
      %1546 = vst.msk [vmem:[%s13] sm:$0x3] %vm1535, %v1545
    $region137: #{tpu_custom_call.1} parent=1 // pred_fallthru
      _
    // Predicated region
    $region138: #{tpu_custom_call.1} parent=1 // pred_check
      _
    $region139: #{tpu_custom_call.1} parent=1 // pred_check_branch
      %1548 = sbr.rel (0) target = $region141
    $region140: #{tpu_custom_call.1} parent=1 // pred_region
      %s1550 = ssub.s32 32, 32
      %1551 = vsyncadd [#allocation10], %s1550
      %s1553 = sshll.u32 [#allocation19], 4
      %s1554 = int_to_ptr.vmem [resolvable:$true] %s1553
      %1556 = dma.vmem_to_hbm [thread:$0]  %s1554, 32, %s12, [#allocation10]
    $region141: #{tpu_custom_call.1} parent=1 // pred_fallthru
      _
    // Predicated region
    $region142: #{tpu_custom_call.1} parent=1 // pred_check
      _
    $region143: #{tpu_custom_call.1} parent=1 // pred_check_branch
      %1558 = sbr.rel (0) target = $region145
    $region144: #{tpu_custom_call.1} parent=1 // pred_region
      _
    $region145: #{tpu_custom_call.1} parent=1 // pred_fallthru
      _
    // Predicated region
    $region146: #{tpu_custom_call.1} parent=1 // pred_check
      _
    $region147: #{tpu_custom_call.1} parent=1 // pred_check_branch
      %1560 = sbr.rel (0) target = $region149
    $region148: #{tpu_custom_call.1} parent=1 // pred_region
      %s1562 = ssub.s32 32, 32
      %1563 = vsyncadd [#allocation21], %s1562
      %s1565 = sshll.u32 [#allocation20], 4
      %s1566 = int_to_ptr.vmem [resolvable:$true] %s1565
      %1568 = dma.vmem_to_hbm [thread:$0]  %s1566, 32, %s14, [#allocation21]
    $region149: #{tpu_custom_call.1} parent=1 // pred_fallthru
      _
    // Predicated region
    $region150: #{tpu_custom_call.1} parent=1 // pred_check
      _
    $region151: #{tpu_custom_call.1} parent=1 // pred_check_branch
      %1570 = sbr.rel (0) target = $region153
    $region152: #{tpu_custom_call.1} parent=1 // pred_region
      %1571 = dma.done [#allocation10], 32
    $region153: #{tpu_custom_call.1} parent=1 // pred_fallthru
      _
    // Predicated region
    $region154: #{tpu_custom_call.1} parent=1 // pred_check
      _
    $region155: #{tpu_custom_call.1} parent=1 // pred_check_branch
      %1573 = sbr.rel (0) target = $region157
    $region156: #{tpu_custom_call.1} parent=1 // pred_region
      _
    $region157: #{tpu_custom_call.1} parent=1 // pred_fallthru
      _
    // Predicated region
    $region158: #{tpu_custom_call.1} parent=1 // pred_check
      _
    $region159: #{tpu_custom_call.1} parent=1 // pred_check_branch
      %1575 = sbr.rel (0) target = $region161
    $region160: #{tpu_custom_call.1} parent=1 // pred_region
      %1576 = dma.done [#allocation21], 32
    $region161: #{tpu_custom_call.1} parent=1 // pred_fallthru
      _
    %1577 = vsyncpa [#allocation9], 1
    %1578 = vsyncpa [#allocation14], 1
    %1579 = vsyncpa [#allocation17], 1
    %1580 = vsyncpa [#allocation10], 1
    %1581 = vsyncpa [#allocation21], 1
    %1582 = vsyncpa [#allocation11], 1
  %1583 = vsyncmov [#allocation3]
  %s1584 = vpop.sfrf %1583
  %p1585 = scmp.eq.s32.totalorder %s1584, 0
  %p1586 = pneg %p1585
  %1588 = shalt.err (%p1586)
  %s1589 = scalar_lea.sflag [#allocation3], 1
  %1590 = vsyncmov %s1589
  %s1591 = vpop.sfrf %1590
  %p1592 = scmp.eq.s32.totalorder %s1591, 0
  %p1593 = pneg %p1592
  %1595 = shalt.err (%p1593)

</llo_original>
